<compile_context>
chip_gen: v5e
topology: v5e:2x2
jax: 0.10.0
libtpu: 0.0.40
codegen_flags: <defaults>
</compile_context>

<pallas_src>
import functools

import jax
import jax.numpy as jnp
from jax import lax
from jax.experimental import pallas as pl
from jax.experimental.pallas import tpu as pltpu

EPS = 1e-5
EXPANSION = 4
THRESH = 0.5
SQRT2 = 2.0 ** 0.5


def _vmem():
    return pl.BlockSpec(memory_space=pltpu.MemorySpace.VMEM)


def _fused_bottleneck_kernel(img_w, n_rows,
                             x_ref, w1_ref, w2_ref, w3_ref, mask_ref, o_ref):
    """Fused BottleneckSNN forward on a channel-major (C, rows) layout.

    x_ref    : (Cin, rpad)  input pixels, zero-padded past n_rows
    w1_ref   : (P,  Cin)    1x1 conv weight (out, in)
    w2_ref   : (9, P, P)    3x3 conv weight, tap-major, each (out, in)
    w3_ref   : (E,  P)      1x1 residual conv weight (out, in)
    mask_ref : (9, rpad)    per-tap boundary validity (row 4 == row validity)
    o_ref    : (E,  rpad)   output spikes
    """
    rpad = x_ref.shape[1]
    inv_n = jnp.float32(1.0 / n_rows)

    # Row-validity mask: the centre tap of the 3x3 stencil is valid at every
    # real pixel and zero in the lane padding, so it doubles as row validity.
    valid = mask_ref[4:5, :]                                            # (1, rpad)

    def bn_stats(y):
        """Biased batch stats over the real rows only (training-mode BN)."""
        m = jnp.sum(y * valid, axis=1, keepdims=True) * inv_n           # (C, 1)
        d = (y - m) * valid
        v = jnp.sum(d * d, axis=1, keepdims=True) * inv_n
        return m, v

    x = x_ref[...]                                                      # (Cin, rpad)

    # ---- SNN layer 1: 1x1 conv -> BN(batch stats) -> Heaviside spike ----
    y1 = jnp.dot(w1_ref[...], x, preferred_element_type=jnp.float32)    # (P, rpad)
    m1, v1 = bn_stats(y1)
    # gamma = thresh > 0, beta = 0  =>  spike <=> (y - mean)/sqrt(var+eps) > 1
    s1 = (y1 > m1 + jnp.sqrt(v1 + EPS)).astype(jnp.float32)

    # ---- SNN layer 2: 3x3 conv (pad=1, stride=1) -> BN -> spike ----
    # Each tap reads win[:, r] == s1[:, r + off] via a static lane roll; the
    # per-tap mask zeroes taps outside the image, which also covers the wrap.
    y2 = jnp.dot(w2_ref[4], s1, preferred_element_type=jnp.float32)     # centre tap
    for ky in range(3):
        for kx in range(3):
            t = ky * 3 + kx
            if t == 4:
                continue
            off = (ky - 1) * img_w + (kx - 1)
            win = pltpu.roll(s1, (-off) % rpad, axis=1)                 # s1[:, r+off]
            win = win * mask_ref[t:t + 1, :]
            y2 = y2 + jnp.dot(w2_ref[t], win,
                              preferred_element_type=jnp.float32)
    m2, v2 = bn_stats(y2)
    s2 = (y2 > m2 + jnp.sqrt(v2 + EPS)).astype(jnp.float32)

    # ---- residual SNN layer: 1x1 conv + BN + bypass-BN(x), then spike ----
    y3 = jnp.dot(w3_ref[...], s2, preferred_element_type=jnp.float32)   # (E, rpad)
    m3, v3 = bn_stats(y3)
    a3 = lax.rsqrt(v3 + EPS)
    mr, vr = bn_stats(x)
    ar = lax.rsqrt(vr + EPS)
    # gamma = thresh/sqrt(2) on both BNs, beta = 0:
    #   spike <=> (y3-m3)*a3 + (x-mr)*ar > sqrt(2)
    #         <=> y3*a3 + x*ar > sqrt(2) + m3*a3 + mr*ar   (per-channel constant RHS)
    rhs = jnp.float32(SQRT2) + m3 * a3 + mr * ar                        # (E, 1)
    o_ref[...] = ((y3 * a3 + x * ar) > rhs).astype(jnp.float32)


def _tap_masks(n, h, w):
    """(9, N*H*W) f32 validity mask per 3x3 tap (zero padding at image borders).

    Depends only on static shapes, so XLA constant-folds it; it is a tiny VMEM
    operand, not per-element wrapper work.
    """
    yy, xx = jnp.meshgrid(jnp.arange(h), jnp.arange(w), indexing="ij")
    xc = jnp.tile(xx.reshape(-1), n)
    yc = jnp.tile(yy.reshape(-1), n)
    taps = []
    for ky in range(3):
        for kx in range(3):
            dy, dx = ky - 1, kx - 1
            taps.append((xc + dx >= 0) & (xc + dx < w) &
                        (yc + dy >= 0) & (yc + dy < h))
    return jnp.stack(taps, axis=0).astype(jnp.float32)                  # (9, rows)


def init_params(key, inplanes, planes):
    """Deterministic synthetic parameters with PyTorch Conv2d weight layouts."""
    e = planes * EXPANSION
    assert inplanes == e, "bypass add requires inplanes == planes * expansion"
    k1, k2, k3 = jax.random.split(key, 3)
    w1 = jax.random.normal(k1, (planes, inplanes, 1, 1), jnp.float32) * 0.2   # 1x1
    w2 = jax.random.normal(k2, (planes, planes, 3, 3), jnp.float32) * 0.2     # 3x3
    w3 = jax.random.normal(k3, (e, planes, 1, 1), jnp.float32) * 0.2          # 1x1
    return w1, w2, w3


@jax.jit
def bottleneck_snn_forward(x_nchw, w1, w2, w3):
    n, cin, h, w = x_nchw.shape
    planes = w1.shape[0]
    e = w3.shape[0]
    rows = n * h * w
    rpad = ((rows + 127) // 128) * 128      # lane-align the pixel axis
    pp = ((planes + 7) // 8) * 8            # sublane-align the bottleneck width

    # Boundary glue (XLA): NCHW -> channel-major (C, N*H*W), zero-pad lanes.
    x2d = jnp.transpose(x_nchw, (1, 0, 2, 3)).reshape(cin, rows)
    x2d = jnp.pad(x2d, ((0, 0), (0, rpad - rows)))

    # Weights in (out, in) matmul form; bottleneck channels zero-padded to pp.
    # Padded channels are inert: their conv outputs are identically zero, so
    # they spike 0 and feed only zero weights downstream.
    w1m = jnp.zeros((pp, cin), jnp.float32).at[:planes].set(w1.reshape(planes, cin))
    w2t = jnp.zeros((9, pp, pp), jnp.float32).at[:, :planes, :planes].set(
        jnp.transpose(w2, (2, 3, 0, 1)).reshape(9, planes, planes))
    w3m = jnp.zeros((e, pp), jnp.float32).at[:, :planes].set(w3.reshape(e, planes))

    # Per-tap boundary masks (constant-folded), zero-padded on the lane axis.
    masks = jnp.pad(_tap_masks(n, h, w), ((0, 0), (0, rpad - rows)))    # (9, rpad)

    flops = 2 * rows * (cin * pp + 9 * pp * pp + pp * e)
    bytes_accessed = 4 * (rpad * (cin + 9 + e)
                          + cin * pp + 9 * pp * pp + pp * e)

    s3 = pl.pallas_call(
        functools.partial(_fused_bottleneck_kernel, w, rows),
        out_shape=jax.ShapeDtypeStruct((e, rpad), jnp.float32),
        in_specs=[_vmem()] * 5,
        out_specs=_vmem(),
        compiler_params=pltpu.CompilerParams(vmem_limit_bytes=32 * 1024 * 1024),
        cost_estimate=pl.CostEstimate(flops=flops,
                                      transcendentals=4 * (pp + e),
                                      bytes_accessed=bytes_accessed),
    )(x2d, w1m, w2t, w3m, masks)

    # Boundary glue: drop lane padding, crop borders, return NCHW like PyTorch.
    out = s3[:, :rows].reshape(e, n, h, w)
    return jnp.transpose(out, (1, 0, 2, 3))[:, :, 1:-1, 1:-1]


def _reference_forward(x, w1, w2, w3):
    """Pure-JAX reference of the PyTorch module (first timestep, training BN)."""
    def conv(a, wgt, pad):
        return lax.conv_general_dilated(a, wgt, window_strides=(1, 1),
                                        padding=[(pad, pad), (pad, pad)],
                                        dimension_numbers=("NCHW", "OIHW", "NCHW"))

    def bn(y, gamma):
        m = jnp.mean(y, axis=(0, 2, 3), keepdims=True)
        v = jnp.mean(jnp.square(y - m), axis=(0, 2, 3), keepdims=True)
        return gamma * (y - m) * lax.rsqrt(v + EPS)

    s1 = (bn(conv(x, w1, 0), THRESH) > THRESH).astype(jnp.float32)
    s2 = (bn(conv(s1, w2, 1), THRESH) > THRESH).astype(jnp.float32)
    pre = bn(conv(s2, w3, 0), THRESH / SQRT2) + bn(x, THRESH / SQRT2)
    out = (pre > THRESH).astype(jnp.float32)
    return out[:, :, 1:-1, 1:-1]


if __name__ == "__main__":
    inplanes, planes = 16, 4          # bypass add requires inplanes == planes * expansion
    n, h, w = 2, 16, 16
    key = jax.random.PRNGKey(0)
    kp, kx = jax.random.split(key)
    w1, w2, w3 = init_params(kp, inplanes, planes)
    x = jax.random.normal(kx, (n, inplanes, h, w), jnp.float32)       # NCHW like PyTorch

    out = jax.block_until_ready(bottleneck_snn_forward(x, w1, w2, w3))

    ref = _reference_forward(x, w1, w2, w3)
    assert out.shape == ref.shape == (n, planes * EXPANSION, h - 2, w - 2), out.shape
    assert bool(jnp.all((out == 0.0) | (out == 1.0)))                 # spikes are binary
    # Binary spikes computed by two different float pipelines can flip on rare
    # near-threshold pixels; a genuine kernel bug shows up as large disagreement.
    agreement = float(jnp.mean((out == ref).astype(jnp.float32)))
    assert agreement >= 0.95, f"kernel/reference spike agreement too low: {agreement:.4f}"
    print("KERNEL_OK")
</pallas_src>

<mosaic_0001>
module attributes {stable_mosaic.version = 11 : i64} {
  func.func @_fused_bottleneck_kernel(%arg0: memref<16x512xf32, #tpu.memory_space<vmem>>, %arg1: memref<8x16xf32, #tpu.memory_space<vmem>>, %arg2: memref<9x8x8xf32, #tpu.memory_space<vmem>>, %arg3: memref<16x8xf32, #tpu.memory_space<vmem>>, %arg4: memref<9x512xf32, #tpu.memory_space<vmem>>, %arg5: memref<16x512xf32, #tpu.memory_space<vmem>>) attributes {dimension_semantics = [], scalar_prefetch = 0 : i64, scratch_operands = 0 : i64, tpu.core_type = #tpu.core_type<tc>} {
    %c4 = arith.constant 4 : index
    %c0 = arith.constant 0 : index
    %0 = vector.load %arg4[%c4, %c0] : memref<9x512xf32, #tpu.memory_space<vmem>>, vector<1x512xf32>
    %c0_0 = arith.constant 0 : index
    %c0_1 = arith.constant 0 : index
    %1 = vector.load %arg0[%c0_0, %c0_1] : memref<16x512xf32, #tpu.memory_space<vmem>>, vector<16x512xf32>
    %c0_2 = arith.constant 0 : index
    %c0_3 = arith.constant 0 : index
    %2 = vector.load %arg1[%c0_2, %c0_3] : memref<8x16xf32, #tpu.memory_space<vmem>>, vector<8x16xf32>
    %cst = arith.constant dense<0.000000e+00> : vector<8x512xf32>
    %3 = tpu.matmul %2, %1, %cst {dimension_numbers = #tpu.dot_dimension_numbers<[1], [0], [0], [1], [0, 0, 1, 1], [], []>} : vector<8x16xf32>, vector<16x512xf32>, vector<8x512xf32> -> vector<8x512xf32>
    %4 = vector.broadcast %0 : vector<1x512xf32> to vector<8x512xf32>
    %5 = arith.mulf %3, %4 : vector<8x512xf32>
    %cst_4 = arith.constant dense<0.000000e+00> : vector<8xf32>
    %6 = vector.multi_reduction <add>, %5, %cst_4 [1] : vector<8x512xf32> to vector<8xf32>
    %7 = vector.shape_cast %6 : vector<8xf32> to vector<8x1xf32>
    %cst_5 = arith.constant 0.001953125 : f32
    %8 = vector.broadcast %cst_5 : f32 to vector<8x1xf32>
    %9 = arith.mulf %7, %8 : vector<8x1xf32>
    %10 = vector.broadcast %9 : vector<8x1xf32> to vector<8x512xf32>
    %11 = arith.subf %3, %10 : vector<8x512xf32>
    %12 = vector.broadcast %0 : vector<1x512xf32> to vector<8x512xf32>
    %13 = arith.mulf %11, %12 : vector<8x512xf32>
    %14 = arith.mulf %13, %13 : vector<8x512xf32>
    %cst_6 = arith.constant dense<0.000000e+00> : vector<8xf32>
    %15 = vector.multi_reduction <add>, %14, %cst_6 [1] : vector<8x512xf32> to vector<8xf32>
    %16 = vector.shape_cast %15 : vector<8xf32> to vector<8x1xf32>
    %cst_7 = arith.constant 0.001953125 : f32
    %17 = vector.broadcast %cst_7 : f32 to vector<8x1xf32>
    %18 = arith.mulf %16, %17 : vector<8x1xf32>
    %cst_8 = arith.constant 9.99999974E-6 : f32
    %19 = vector.broadcast %cst_8 : f32 to vector<8x1xf32>
    %20 = arith.addf %18, %19 : vector<8x1xf32>
    %21 = math.sqrt %20 : vector<8x1xf32>
    %22 = arith.addf %9, %21 : vector<8x1xf32>
    %23 = vector.broadcast %22 : vector<8x1xf32> to vector<8x512xf32>
    %24 = arith.cmpf ogt, %3, %23 : vector<8x512xf32>
    %25 = arith.extui %24 : vector<8x512xi1> to vector<8x512xi32>
    %26 = arith.sitofp %25 : vector<8x512xi32> to vector<8x512xf32>
    %c4_9 = arith.constant 4 : index
    %c0_10 = arith.constant 0 : index
    %c0_11 = arith.constant 0 : index
    %27 = vector.load %arg2[%c4_9, %c0_10, %c0_11] : memref<9x8x8xf32, #tpu.memory_space<vmem>>, vector<1x8x8xf32>
    %28 = vector.shape_cast %27 : vector<1x8x8xf32> to vector<8x8xf32>
    %cst_12 = arith.constant dense<0.000000e+00> : vector<8x512xf32>
    %29 = tpu.matmul %28, %26, %cst_12 {dimension_numbers = #tpu.dot_dimension_numbers<[1], [0], [0], [1], [0, 0, 1, 1], [], []>} : vector<8x8xf32>, vector<8x512xf32>, vector<8x512xf32> -> vector<8x512xf32>
    %c17_i32 = arith.constant 17 : i32
    %30 = tpu.dynamic_rotate %26 by %c17_i32 dim 1 : vector<8x512xf32>, i32 -> vector<8x512xf32>
    %c0_13 = arith.constant 0 : index
    %c0_14 = arith.constant 0 : index
    %31 = vector.load %arg4[%c0_13, %c0_14] : memref<9x512xf32, #tpu.memory_space<vmem>>, vector<1x512xf32>
    %32 = vector.broadcast %31 : vector<1x512xf32> to vector<8x512xf32>
    %33 = arith.mulf %30, %32 : vector<8x512xf32>
    %c0_15 = arith.constant 0 : index
    %c0_16 = arith.constant 0 : index
    %c0_17 = arith.constant 0 : index
    %34 = vector.load %arg2[%c0_15, %c0_16, %c0_17] : memref<9x8x8xf32, #tpu.memory_space<vmem>>, vector<1x8x8xf32>
    %35 = vector.shape_cast %34 : vector<1x8x8xf32> to vector<8x8xf32>
    %cst_18 = arith.constant dense<0.000000e+00> : vector<8x512xf32>
    %36 = tpu.matmul %35, %33, %cst_18 {dimension_numbers = #tpu.dot_dimension_numbers<[1], [0], [0], [1], [0, 0, 1, 1], [], []>} : vector<8x8xf32>, vector<8x512xf32>, vector<8x512xf32> -> vector<8x512xf32>
    %37 = arith.addf %29, %36 : vector<8x512xf32>
    %c16_i32 = arith.constant 16 : i32
    %38 = tpu.dynamic_rotate %26 by %c16_i32 dim 1 : vector<8x512xf32>, i32 -> vector<8x512xf32>
    %c1 = arith.constant 1 : index
    %c0_19 = arith.constant 0 : index
    %39 = vector.load %arg4[%c1, %c0_19] : memref<9x512xf32, #tpu.memory_space<vmem>>, vector<1x512xf32>
    %40 = vector.broadcast %39 : vector<1x512xf32> to vector<8x512xf32>
    %41 = arith.mulf %38, %40 : vector<8x512xf32>
    %c1_20 = arith.constant 1 : index
    %c0_21 = arith.constant 0 : index
    %c0_22 = arith.constant 0 : index
    %42 = vector.load %arg2[%c1_20, %c0_21, %c0_22] : memref<9x8x8xf32, #tpu.memory_space<vmem>>, vector<1x8x8xf32>
    %43 = vector.shape_cast %42 : vector<1x8x8xf32> to vector<8x8xf32>
    %cst_23 = arith.constant dense<0.000000e+00> : vector<8x512xf32>
    %44 = tpu.matmul %43, %41, %cst_23 {dimension_numbers = #tpu.dot_dimension_numbers<[1], [0], [0], [1], [0, 0, 1, 1], [], []>} : vector<8x8xf32>, vector<8x512xf32>, vector<8x512xf32> -> vector<8x512xf32>
    %45 = arith.addf %37, %44 : vector<8x512xf32>
    %c15_i32 = arith.constant 15 : i32
    %46 = tpu.dynamic_rotate %26 by %c15_i32 dim 1 : vector<8x512xf32>, i32 -> vector<8x512xf32>
    %c2 = arith.constant 2 : index
    %c0_24 = arith.constant 0 : index
    %47 = vector.load %arg4[%c2, %c0_24] : memref<9x512xf32, #tpu.memory_space<vmem>>, vector<1x512xf32>
    %48 = vector.broadcast %47 : vector<1x512xf32> to vector<8x512xf32>
    %49 = arith.mulf %46, %48 : vector<8x512xf32>
    %c2_25 = arith.constant 2 : index
    %c0_26 = arith.constant 0 : index
    %c0_27 = arith.constant 0 : index
    %50 = vector.load %arg2[%c2_25, %c0_26, %c0_27] : memref<9x8x8xf32, #tpu.memory_space<vmem>>, vector<1x8x8xf32>
    %51 = vector.shape_cast %50 : vector<1x8x8xf32> to vector<8x8xf32>
    %cst_28 = arith.constant dense<0.000000e+00> : vector<8x512xf32>
    %52 = tpu.matmul %51, %49, %cst_28 {dimension_numbers = #tpu.dot_dimension_numbers<[1], [0], [0], [1], [0, 0, 1, 1], [], []>} : vector<8x8xf32>, vector<8x512xf32>, vector<8x512xf32> -> vector<8x512xf32>
    %53 = arith.addf %45, %52 : vector<8x512xf32>
    %c1_i32 = arith.constant 1 : i32
    %54 = tpu.dynamic_rotate %26 by %c1_i32 dim 1 : vector<8x512xf32>, i32 -> vector<8x512xf32>
    %c3 = arith.constant 3 : index
    %c0_29 = arith.constant 0 : index
    %55 = vector.load %arg4[%c3, %c0_29] : memref<9x512xf32, #tpu.memory_space<vmem>>, vector<1x512xf32>
    %56 = vector.broadcast %55 : vector<1x512xf32> to vector<8x512xf32>
    %57 = arith.mulf %54, %56 : vector<8x512xf32>
    %c3_30 = arith.constant 3 : index
    %c0_31 = arith.constant 0 : index
    %c0_32 = arith.constant 0 : index
    %58 = vector.load %arg2[%c3_30, %c0_31, %c0_32] : memref<9x8x8xf32, #tpu.memory_space<vmem>>, vector<1x8x8xf32>
    %59 = vector.shape_cast %58 : vector<1x8x8xf32> to vector<8x8xf32>
    %cst_33 = arith.constant dense<0.000000e+00> : vector<8x512xf32>
    %60 = tpu.matmul %59, %57, %cst_33 {dimension_numbers = #tpu.dot_dimension_numbers<[1], [0], [0], [1], [0, 0, 1, 1], [], []>} : vector<8x8xf32>, vector<8x512xf32>, vector<8x512xf32> -> vector<8x512xf32>
    %61 = arith.addf %53, %60 : vector<8x512xf32>
    %c511_i32 = arith.constant 511 : i32
    %62 = tpu.dynamic_rotate %26 by %c511_i32 dim 1 : vector<8x512xf32>, i32 -> vector<8x512xf32>
    %c5 = arith.constant 5 : index
    %c0_34 = arith.constant 0 : index
    %63 = vector.load %arg4[%c5, %c0_34] : memref<9x512xf32, #tpu.memory_space<vmem>>, vector<1x512xf32>
    %64 = vector.broadcast %63 : vector<1x512xf32> to vector<8x512xf32>
    %65 = arith.mulf %62, %64 : vector<8x512xf32>
    %c5_35 = arith.constant 5 : index
    %c0_36 = arith.constant 0 : index
    %c0_37 = arith.constant 0 : index
    %66 = vector.load %arg2[%c5_35, %c0_36, %c0_37] : memref<9x8x8xf32, #tpu.memory_space<vmem>>, vector<1x8x8xf32>
    %67 = vector.shape_cast %66 : vector<1x8x8xf32> to vector<8x8xf32>
    %cst_38 = arith.constant dense<0.000000e+00> : vector<8x512xf32>
    %68 = tpu.matmul %67, %65, %cst_38 {dimension_numbers = #tpu.dot_dimension_numbers<[1], [0], [0], [1], [0, 0, 1, 1], [], []>} : vector<8x8xf32>, vector<8x512xf32>, vector<8x512xf32> -> vector<8x512xf32>
    %69 = arith.addf %61, %68 : vector<8x512xf32>
    %c497_i32 = arith.constant 497 : i32
    %70 = tpu.dynamic_rotate %26 by %c497_i32 dim 1 : vector<8x512xf32>, i32 -> vector<8x512xf32>
    %c6 = arith.constant 6 : index
    %c0_39 = arith.constant 0 : index
    %71 = vector.load %arg4[%c6, %c0_39] : memref<9x512xf32, #tpu.memory_space<vmem>>, vector<1x512xf32>
    %72 = vector.broadcast %71 : vector<1x512xf32> to vector<8x512xf32>
    %73 = arith.mulf %70, %72 : vector<8x512xf32>
    %c6_40 = arith.constant 6 : index
    %c0_41 = arith.constant 0 : index
    %c0_42 = arith.constant 0 : index
    %74 = vector.load %arg2[%c6_40, %c0_41, %c0_42] : memref<9x8x8xf32, #tpu.memory_space<vmem>>, vector<1x8x8xf32>
    %75 = vector.shape_cast %74 : vector<1x8x8xf32> to vector<8x8xf32>
    %cst_43 = arith.constant dense<0.000000e+00> : vector<8x512xf32>
    %76 = tpu.matmul %75, %73, %cst_43 {dimension_numbers = #tpu.dot_dimension_numbers<[1], [0], [0], [1], [0, 0, 1, 1], [], []>} : vector<8x8xf32>, vector<8x512xf32>, vector<8x512xf32> -> vector<8x512xf32>
    %77 = arith.addf %69, %76 : vector<8x512xf32>
    %c496_i32 = arith.constant 496 : i32
    %78 = tpu.dynamic_rotate %26 by %c496_i32 dim 1 : vector<8x512xf32>, i32 -> vector<8x512xf32>
    %c7 = arith.constant 7 : index
    %c0_44 = arith.constant 0 : index
    %79 = vector.load %arg4[%c7, %c0_44] : memref<9x512xf32, #tpu.memory_space<vmem>>, vector<1x512xf32>
    %80 = vector.broadcast %79 : vector<1x512xf32> to vector<8x512xf32>
    %81 = arith.mulf %78, %80 : vector<8x512xf32>
    %c7_45 = arith.constant 7 : index
    %c0_46 = arith.constant 0 : index
    %c0_47 = arith.constant 0 : index
    %82 = vector.load %arg2[%c7_45, %c0_46, %c0_47] : memref<9x8x8xf32, #tpu.memory_space<vmem>>, vector<1x8x8xf32>
    %83 = vector.shape_cast %82 : vector<1x8x8xf32> to vector<8x8xf32>
    %cst_48 = arith.constant dense<0.000000e+00> : vector<8x512xf32>
    %84 = tpu.matmul %83, %81, %cst_48 {dimension_numbers = #tpu.dot_dimension_numbers<[1], [0], [0], [1], [0, 0, 1, 1], [], []>} : vector<8x8xf32>, vector<8x512xf32>, vector<8x512xf32> -> vector<8x512xf32>
    %85 = arith.addf %77, %84 : vector<8x512xf32>
    %c495_i32 = arith.constant 495 : i32
    %86 = tpu.dynamic_rotate %26 by %c495_i32 dim 1 : vector<8x512xf32>, i32 -> vector<8x512xf32>
    %c8 = arith.constant 8 : index
    %c0_49 = arith.constant 0 : index
    %87 = vector.load %arg4[%c8, %c0_49] : memref<9x512xf32, #tpu.memory_space<vmem>>, vector<1x512xf32>
    %88 = vector.broadcast %87 : vector<1x512xf32> to vector<8x512xf32>
    %89 = arith.mulf %86, %88 : vector<8x512xf32>
    %c8_50 = arith.constant 8 : index
    %c0_51 = arith.constant 0 : index
    %c0_52 = arith.constant 0 : index
    %90 = vector.load %arg2[%c8_50, %c0_51, %c0_52] : memref<9x8x8xf32, #tpu.memory_space<vmem>>, vector<1x8x8xf32>
    %91 = vector.shape_cast %90 : vector<1x8x8xf32> to vector<8x8xf32>
    %cst_53 = arith.constant dense<0.000000e+00> : vector<8x512xf32>
    %92 = tpu.matmul %91, %89, %cst_53 {dimension_numbers = #tpu.dot_dimension_numbers<[1], [0], [0], [1], [0, 0, 1, 1], [], []>} : vector<8x8xf32>, vector<8x512xf32>, vector<8x512xf32> -> vector<8x512xf32>
    %93 = arith.addf %85, %92 : vector<8x512xf32>
    %94 = vector.broadcast %0 : vector<1x512xf32> to vector<8x512xf32>
    %95 = arith.mulf %93, %94 : vector<8x512xf32>
    %cst_54 = arith.constant dense<0.000000e+00> : vector<8xf32>
    %96 = vector.multi_reduction <add>, %95, %cst_54 [1] : vector<8x512xf32> to vector<8xf32>
    %97 = vector.shape_cast %96 : vector<8xf32> to vector<8x1xf32>
    %cst_55 = arith.constant 0.001953125 : f32
    %98 = vector.broadcast %cst_55 : f32 to vector<8x1xf32>
    %99 = arith.mulf %97, %98 : vector<8x1xf32>
    %100 = vector.broadcast %99 : vector<8x1xf32> to vector<8x512xf32>
    %101 = arith.subf %93, %100 : vector<8x512xf32>
    %102 = vector.broadcast %0 : vector<1x512xf32> to vector<8x512xf32>
    %103 = arith.mulf %101, %102 : vector<8x512xf32>
    %104 = arith.mulf %103, %103 : vector<8x512xf32>
    %cst_56 = arith.constant dense<0.000000e+00> : vector<8xf32>
    %105 = vector.multi_reduction <add>, %104, %cst_56 [1] : vector<8x512xf32> to vector<8xf32>
    %106 = vector.shape_cast %105 : vector<8xf32> to vector<8x1xf32>
    %cst_57 = arith.constant 0.001953125 : f32
    %107 = vector.broadcast %cst_57 : f32 to vector<8x1xf32>
    %108 = arith.mulf %106, %107 : vector<8x1xf32>
    %cst_58 = arith.constant 9.99999974E-6 : f32
    %109 = vector.broadcast %cst_58 : f32 to vector<8x1xf32>
    %110 = arith.addf %108, %109 : vector<8x1xf32>
    %111 = math.sqrt %110 : vector<8x1xf32>
    %112 = arith.addf %99, %111 : vector<8x1xf32>
    %113 = vector.broadcast %112 : vector<8x1xf32> to vector<8x512xf32>
    %114 = arith.cmpf ogt, %93, %113 : vector<8x512xf32>
    %115 = arith.extui %114 : vector<8x512xi1> to vector<8x512xi32>
    %116 = arith.sitofp %115 : vector<8x512xi32> to vector<8x512xf32>
    %c0_59 = arith.constant 0 : index
    %c0_60 = arith.constant 0 : index
    %117 = vector.load %arg3[%c0_59, %c0_60] : memref<16x8xf32, #tpu.memory_space<vmem>>, vector<16x8xf32>
    %cst_61 = arith.constant dense<0.000000e+00> : vector<16x512xf32>
    %118 = tpu.matmul %117, %116, %cst_61 {dimension_numbers = #tpu.dot_dimension_numbers<[1], [0], [0], [1], [0, 0, 1, 1], [], []>} : vector<16x8xf32>, vector<8x512xf32>, vector<16x512xf32> -> vector<16x512xf32>
    %119 = vector.broadcast %0 : vector<1x512xf32> to vector<16x512xf32>
    %120 = arith.mulf %118, %119 : vector<16x512xf32>
    %cst_62 = arith.constant dense<0.000000e+00> : vector<16xf32>
    %121 = vector.multi_reduction <add>, %120, %cst_62 [1] : vector<16x512xf32> to vector<16xf32>
    %122 = vector.shape_cast %121 : vector<16xf32> to vector<16x1xf32>
    %cst_63 = arith.constant 0.001953125 : f32
    %123 = vector.broadcast %cst_63 : f32 to vector<16x1xf32>
    %124 = arith.mulf %122, %123 : vector<16x1xf32>
    %125 = vector.broadcast %124 : vector<16x1xf32> to vector<16x512xf32>
    %126 = arith.subf %118, %125 : vector<16x512xf32>
    %127 = vector.broadcast %0 : vector<1x512xf32> to vector<16x512xf32>
    %128 = arith.mulf %126, %127 : vector<16x512xf32>
    %129 = arith.mulf %128, %128 : vector<16x512xf32>
    %cst_64 = arith.constant dense<0.000000e+00> : vector<16xf32>
    %130 = vector.multi_reduction <add>, %129, %cst_64 [1] : vector<16x512xf32> to vector<16xf32>
    %131 = vector.shape_cast %130 : vector<16xf32> to vector<16x1xf32>
    %cst_65 = arith.constant 0.001953125 : f32
    %132 = vector.broadcast %cst_65 : f32 to vector<16x1xf32>
    %133 = arith.mulf %131, %132 : vector<16x1xf32>
    %cst_66 = arith.constant 9.99999974E-6 : f32
    %134 = vector.broadcast %cst_66 : f32 to vector<16x1xf32>
    %135 = arith.addf %133, %134 : vector<16x1xf32>
    %136 = math.rsqrt %135 : vector<16x1xf32>
    %137 = vector.broadcast %0 : vector<1x512xf32> to vector<16x512xf32>
    %138 = arith.mulf %1, %137 : vector<16x512xf32>
    %cst_67 = arith.constant dense<0.000000e+00> : vector<16xf32>
    %139 = vector.multi_reduction <add>, %138, %cst_67 [1] : vector<16x512xf32> to vector<16xf32>
    %140 = vector.shape_cast %139 : vector<16xf32> to vector<16x1xf32>
    %cst_68 = arith.constant 0.001953125 : f32
    %141 = vector.broadcast %cst_68 : f32 to vector<16x1xf32>
    %142 = arith.mulf %140, %141 : vector<16x1xf32>
    %143 = vector.broadcast %142 : vector<16x1xf32> to vector<16x512xf32>
    %144 = arith.subf %1, %143 : vector<16x512xf32>
    %145 = vector.broadcast %0 : vector<1x512xf32> to vector<16x512xf32>
    %146 = arith.mulf %144, %145 : vector<16x512xf32>
    %147 = arith.mulf %146, %146 : vector<16x512xf32>
    %cst_69 = arith.constant dense<0.000000e+00> : vector<16xf32>
    %148 = vector.multi_reduction <add>, %147, %cst_69 [1] : vector<16x512xf32> to vector<16xf32>
    %149 = vector.shape_cast %148 : vector<16xf32> to vector<16x1xf32>
    %cst_70 = arith.constant 0.001953125 : f32
    %150 = vector.broadcast %cst_70 : f32 to vector<16x1xf32>
    %151 = arith.mulf %149, %150 : vector<16x1xf32>
    %cst_71 = arith.constant 9.99999974E-6 : f32
    %152 = vector.broadcast %cst_71 : f32 to vector<16x1xf32>
    %153 = arith.addf %151, %152 : vector<16x1xf32>
    %154 = math.rsqrt %153 : vector<16x1xf32>
    %155 = arith.mulf %124, %136 : vector<16x1xf32>
    %cst_72 = arith.constant 1.41421354 : f32
    %156 = vector.broadcast %cst_72 : f32 to vector<16x1xf32>
    %157 = arith.addf %156, %155 : vector<16x1xf32>
    %158 = arith.mulf %142, %154 : vector<16x1xf32>
    %159 = arith.addf %157, %158 : vector<16x1xf32>
    %160 = vector.broadcast %136 : vector<16x1xf32> to vector<16x512xf32>
    %161 = arith.mulf %118, %160 : vector<16x512xf32>
    %162 = vector.broadcast %154 : vector<16x1xf32> to vector<16x512xf32>
    %163 = arith.mulf %1, %162 : vector<16x512xf32>
    %164 = arith.addf %161, %163 : vector<16x512xf32>
    %165 = vector.broadcast %159 : vector<16x1xf32> to vector<16x512xf32>
    %166 = arith.cmpf ogt, %164, %165 : vector<16x512xf32>
    %167 = arith.extui %166 : vector<16x512xi1> to vector<16x512xi32>
    %168 = arith.sitofp %167 : vector<16x512xi32> to vector<16x512xf32>
    %c0_73 = arith.constant 0 : index
    %c0_74 = arith.constant 0 : index
    %169 = vector.load %arg5[%c0_73, %c0_74] : memref<16x512xf32, #tpu.memory_space<vmem>>, vector<16x512xf32>
    tpu.vector_store %arg5[%c0_73, %c0_74], %168 {strides = array<i32>} : memref<16x512xf32, #tpu.memory_space<vmem>>, vector<16x512xf32>,
    return
  }
}

</mosaic_0001>

<llo_original>
// kernel: bottleneck_snn_forward.1
$region0: #{bottleneck_snn_forward.1}
  #allocation0 [shape = 'u32[]', space=smem, size = 0x4, offset = 0x4, fixed_abs, tag = 'smem constant byte address 0x4 - core index']
  #allocation1 [shape = 'u32[72,128]{1,0:T(1,128)}', space=vmem, size = 0x9000, scoped, tag = 'internal scratch']
  %s0 = inlined_call_operand.vmem [shape: f32[16,512], index: 0, kind: input, shape index: {}]
  %s1 = inlined_call_operand.vmem [shape: f32[8,16], index: 1, kind: input, shape index: {}]
  %s2 = inlined_call_operand.vmem [shape: f32[9,8,8], index: 2, kind: input, shape index: {}]
  %s3 = inlined_call_operand.vmem [shape: f32[16,8], index: 3, kind: input, shape index: {}]
  %s4 = inlined_call_operand.vmem [shape: f32[9,512], index: 4, kind: input, shape index: {}]
  %s5 = inlined_call_operand.vmem [shape: f32[16,512], index: 5, kind: output, shape index: {}]
  %s6 = sld [smem:[#allocation0]]
  $region30: #{bottleneck_snn_forward.1} parent=0
    _
  %s8 = ssub.s32 1, %s6
  %s9 = scalar_select 0, %s8, %s6
  // Predicated region
  $region2: #{bottleneck_snn_forward.1} parent=0 // pred_check
    _
  $region3: #{bottleneck_snn_forward.1} parent=0 // pred_check_branch
    %11 = sbr.rel (0) target = $region5
  $region4: #{bottleneck_snn_forward.1} parent=0 // pred_region
    _
  $region5: #{bottleneck_snn_forward.1} parent=0 // pred_fallthru
    _
  // Predicated region
  $region6: #{bottleneck_snn_forward.1} parent=0 // pred_check
    _
  $region7: #{bottleneck_snn_forward.1} parent=0 // pred_check_branch
    %13 = sbr.rel (0) target = $region9
  $region8: #{bottleneck_snn_forward.1} parent=0 // pred_region
    _
  $region9: #{bottleneck_snn_forward.1} parent=0 // pred_fallthru
    _
  // Predicated region
  $region10: #{bottleneck_snn_forward.1} parent=0 // pred_check
    _
  $region11: #{bottleneck_snn_forward.1} parent=0 // pred_check_branch
    %15 = sbr.rel (0) target = $region13
  $region12: #{bottleneck_snn_forward.1} parent=0 // pred_region
    _
  $region13: #{bottleneck_snn_forward.1} parent=0 // pred_fallthru
    _
  // Predicated region
  $region14: #{bottleneck_snn_forward.1} parent=0 // pred_check
    _
  $region15: #{bottleneck_snn_forward.1} parent=0 // pred_check_branch
    %17 = sbr.rel (0) target = $region17
  $region16: #{bottleneck_snn_forward.1} parent=0 // pred_region
    _
  $region17: #{bottleneck_snn_forward.1} parent=0 // pred_fallthru
    _
  // Predicated region
  $region18: #{bottleneck_snn_forward.1} parent=0 // pred_check
    _
  $region19: #{bottleneck_snn_forward.1} parent=0 // pred_check_branch
    %19 = sbr.rel (0) target = $region21
  $region20: #{bottleneck_snn_forward.1} parent=0 // pred_region
    _
  $region21: #{bottleneck_snn_forward.1} parent=0 // pred_fallthru
    _
  %s20 = scalar_lea.vmem %s4, 4
  %v21 = vld [vmem:[%s20] ss:$8 sm:$0xf]
  %v22 = vld [vmem:[%s0] sm:$0xff]
  %v23 = vld [vmem:[%s0 + $0x8] sm:$0xff]
  %v24 = vld [vmem:[%s0 + $0x10] sm:$0xff]
  %v25 = vld [vmem:[%s0 + $0x18] sm:$0xff]
  %v26 = vld [vmem:[%s0 + $0x20] sm:$0xff]
  %v27 = vld [vmem:[%s0 + $0x28] sm:$0xff]
  %v28 = vld [vmem:[%s0 + $0x30] sm:$0xff]
  %v29 = vld [vmem:[%s0 + $0x38] sm:$0xff]
  %v30 = vld [vmem:[%s1] sm:$0xff]
  %vm31 = vcmask 130048
  %v33 = vsel %vm31, %v30, 0
  %35 = vmatpush.msra.mxu0 0.0
  %36 = vmatpush.msra.mxu0 0.0
  %37 = vmatpush.msra.mxu0 0.0
  %38 = vmatpush.msra.mxu0 0.0
  %39 = vmatpush.msra.mxu0 0.0
  %40 = vmatpush.msra.mxu0 0.0
  %41 = vmatpush.msra.mxu0 0.0
  %42 = vmatpush.msra.mxu0 0.0
  %43 = vmatpush.msra.mxu0 0.0
  %44 = vmatpush.msra.mxu0 0.0
  %45 = vmatpush.msra.mxu0 0.0
  %46 = vmatpush.msra.mxu0 0.0
  %47 = vmatpush.msra.mxu0 0.0
  %48 = vmatpush.msra.mxu0 0.0
  %49 = vmatpush.msra.mxu0 %v26
  %50 = vmatpush.msra.mxu0 %v22
  %51 = vmatmul.f32.gmra.mxu0 %v33
  %v52 = vpop.f32.mrf.mxu0
  %v53 = vadd.f32 0.0, %v52
  %54 = vdwg.mxu0
  %55 = vmatpush.msra.mxu0 0.0
  %56 = vmatpush.msra.mxu0 0.0
  %57 = vmatpush.msra.mxu0 0.0
  %58 = vmatpush.msra.mxu0 0.0
  %59 = vmatpush.msra.mxu0 0.0
  %60 = vmatpush.msra.mxu0 0.0
  %61 = vmatpush.msra.mxu0 0.0
  %62 = vmatpush.msra.mxu0 0.0
  %63 = vmatpush.msra.mxu0 0.0
  %64 = vmatpush.msra.mxu0 0.0
  %65 = vmatpush.msra.mxu0 0.0
  %66 = vmatpush.msra.mxu0 0.0
  %67 = vmatpush.msra.mxu0 0.0
  %68 = vmatpush.msra.mxu0 0.0
  %69 = vmatpush.msra.mxu0 %v27
  %70 = vmatpush.msra.mxu0 %v23
  %71 = vmatmul.f32.gmra.mxu0 %v33
  %v72 = vpop.f32.mrf.mxu0
  %v73 = vadd.f32 0.0, %v72
  %74 = vdwg.mxu0
  %75 = vmatpush.msra.mxu0 0.0
  %76 = vmatpush.msra.mxu0 0.0
  %77 = vmatpush.msra.mxu0 0.0
  %78 = vmatpush.msra.mxu0 0.0
  %79 = vmatpush.msra.mxu0 0.0
  %80 = vmatpush.msra.mxu0 0.0
  %81 = vmatpush.msra.mxu0 0.0
  %82 = vmatpush.msra.mxu0 0.0
  %83 = vmatpush.msra.mxu0 0.0
  %84 = vmatpush.msra.mxu0 0.0
  %85 = vmatpush.msra.mxu0 0.0
  %86 = vmatpush.msra.mxu0 0.0
  %87 = vmatpush.msra.mxu0 0.0
  %88 = vmatpush.msra.mxu0 0.0
  %89 = vmatpush.msra.mxu0 %v28
  %90 = vmatpush.msra.mxu0 %v24
  %91 = vmatmul.f32.gmra.mxu0 %v33
  %v92 = vpop.f32.mrf.mxu0
  %v93 = vadd.f32 0.0, %v92
  %94 = vdwg.mxu0
  %95 = vmatpush.msra.mxu0 0.0
  %96 = vmatpush.msra.mxu0 0.0
  %97 = vmatpush.msra.mxu0 0.0
  %98 = vmatpush.msra.mxu0 0.0
  %99 = vmatpush.msra.mxu0 0.0
  %100 = vmatpush.msra.mxu0 0.0
  %101 = vmatpush.msra.mxu0 0.0
  %102 = vmatpush.msra.mxu0 0.0
  %103 = vmatpush.msra.mxu0 0.0
  %104 = vmatpush.msra.mxu0 0.0
  %105 = vmatpush.msra.mxu0 0.0
  %106 = vmatpush.msra.mxu0 0.0
  %107 = vmatpush.msra.mxu0 0.0
  %108 = vmatpush.msra.mxu0 0.0
  %109 = vmatpush.msra.mxu0 %v29
  %110 = vmatpush.msra.mxu0 %v25
  %111 = vmatmul.f32.gmra.mxu0 %v33
  %v112 = vpop.f32.mrf.mxu0
  %v113 = vadd.f32 0.0, %v112
  %114 = vdwg.mxu0
  %v116 = vperm.slane %v21, 0
  %v117 = vperm.slane %v21, 1
  %v118 = vperm.slane %v21, 2
  %v119 = vperm.slane %v21, 3
  %v124 = vmul.f32 %v53, %v116
  %v125 = vmul.f32 %v73, %v117
  %v126 = vmul.f32 %v93, %v118
  %v127 = vmul.f32 %v113, %v119
  %v128 = vadd.f32 %v124, %v125
  %v129 = vadd.f32 %v128, %v126
  %v130 = vadd.f32 %v129, %v127
  %131 = vadd.xlane.f32.xlu0 %v130
  %v132 = vpop.xlane.xlu0 %131
  %v133 = vmul.f32 %v132, 0.001953125
  %v134 = vsub.f32 %v53, %v133
  %v135 = vsub.f32 %v73, %v133
  %v136 = vsub.f32 %v93, %v133
  %v137 = vsub.f32 %v113, %v133
  %v138 = vmul.f32 %v134, %v116
  %v139 = vmul.f32 %v135, %v117
  %v140 = vmul.f32 %v136, %v118
  %v141 = vmul.f32 %v137, %v119
  %v142 = vmul.f32 %v138, %v138
  %v143 = vmul.f32 %v139, %v139
  %v144 = vmul.f32 %v140, %v140
  %v145 = vmul.f32 %v141, %v141
  %v146 = vadd.f32 %v142, %v143
  %v147 = vadd.f32 %v146, %v144
  %v148 = vadd.f32 %v147, %v145
  %149 = vadd.xlane.f32.xlu0 %v148
  %v150 = vpop.xlane.xlu0 %149
  %v151 = vmul.f32 %v150, 0.001953125
  %v152 = vadd.f32 %v151, 1e-05
  %v153 = vrsqrt.pop %v152
  %v154 = vmul.f32 %v153, %v152
  %v155 = vmul.f32 %v154, %v153
  %v156 = vmul.f32 0.5, %v155
  %v157 = vsub.f32 1.5, %v156
  %v158 = vmul.f32 %v153, %v157
  %v159 = vmul.f32 %v152, %v158
  %vm160 = vcmp.eq.f32.partialorder %v152, inf
  %v161 = vsel %vm160, %v152, %v159
  %vm162 = vcmp.eq.f32.partialorder %v152, 0.0
  %v163 = vand.u32 %v152, 2147483648
  %v164 = vsel %vm162, %v163, %v161
  %v165 = vadd.f32 %v133, %v164
  %vm166 = vcmp.gt.f32.partialorder %v53, %v165
  %vm167 = vcmp.gt.f32.partialorder %v73, %v165
  %vm168 = vcmp.gt.f32.partialorder %v93, %v165
  %vm169 = vcmp.gt.f32.partialorder %v113, %v165
  %v170 = vsel %vm166, 1, 0
  %v171 = vsel %vm167, 1, 0
  %v172 = vsel %vm168, 1, 0
  %v173 = vsel %vm169, 1, 0
  %v174 = vcvt.s32.f32 %v170
  %v175 = vcvt.s32.f32 %v171
  %v176 = vcvt.s32.f32 %v172
  %v177 = vcvt.s32.f32 %v173
  %s178 = scalar_lea.vmem %s2, 32
  %v179 = vld [vmem:[%s178] sm:$0xff]
  %180 = vrot.lane.b32.xlu0 %v174, 17
  %v181 = vpop.permute.xlu0 %180
  %182 = vrot.lane.b32.xlu0 %v175, 17
  %v183 = vpop.permute.xlu0 %182
  %184 = vrot.lane.b32.xlu0 %v176, 17
  %v185 = vpop.permute.xlu0 %184
  %186 = vrot.lane.b32.xlu0 %v177, 17
  %v187 = vpop.permute.xlu0 %186
  %v188 = vlaneseq
  %v189 = vand.u32 %v188, 127
  %vm190 = vcmp.lt.s32.totalorder %v189, 17
  %v191 = vsel %vm190, %v185, %v187
  %v192 = vsel %vm190, %v183, %v185
  %v193 = vsel %vm190, %v181, %v183
  %v194 = vsel %vm190, %v187, %v181
  %v195 = vld [vmem:[%s4] ss:$8 sm:$0xf]
  %v197 = vperm.slane %v195, 0
  %v198 = vperm.slane %v195, 1
  %v199 = vperm.slane %v195, 2
  %v200 = vperm.slane %v195, 3
  %v205 = vmul.f32 %v194, %v197
  %v206 = vmul.f32 %v193, %v198
  %v207 = vmul.f32 %v192, %v199
  %v208 = vmul.f32 %v191, %v200
  %v209 = vld [vmem:[%s2] sm:$0xff]
  %vm210 = vcmask 64512
  %v212 = vsel %vm210, %v209, 0
  %214 = vmatpush.msra.mxu0 0.0
  %215 = vmatpush.msra.mxu0 0.0
  %216 = vmatpush.msra.mxu0 0.0
  %217 = vmatpush.msra.mxu0 0.0
  %218 = vmatpush.msra.mxu0 0.0
  %219 = vmatpush.msra.mxu0 0.0
  %220 = vmatpush.msra.mxu0 0.0
  %221 = vmatpush.msra.mxu0 0.0
  %222 = vmatpush.msra.mxu0 0.0
  %223 = vmatpush.msra.mxu0 0.0
  %224 = vmatpush.msra.mxu0 0.0
  %225 = vmatpush.msra.mxu0 0.0
  %226 = vmatpush.msra.mxu0 0.0
  %227 = vmatpush.msra.mxu0 0.0
  %228 = vmatpush.msra.mxu0 0.0
  %229 = vmatpush.msra.mxu0 %v205
  %230 = vmatmul.f32.gmra.mxu0 %v212
  %v231 = vpop.f32.mrf.mxu0
  %v232 = vadd.f32 0.0, %v231
  %233 = vdwg.mxu0
  %234 = vmatpush.msra.mxu0 0.0
  %235 = vmatpush.msra.mxu0 0.0
  %236 = vmatpush.msra.mxu0 0.0
  %237 = vmatpush.msra.mxu0 0.0
  %238 = vmatpush.msra.mxu0 0.0
  %239 = vmatpush.msra.mxu0 0.0
  %240 = vmatpush.msra.mxu0 0.0
  %241 = vmatpush.msra.mxu0 0.0
  %242 = vmatpush.msra.mxu0 0.0
  %243 = vmatpush.msra.mxu0 0.0
  %244 = vmatpush.msra.mxu0 0.0
  %245 = vmatpush.msra.mxu0 0.0
  %246 = vmatpush.msra.mxu0 0.0
  %247 = vmatpush.msra.mxu0 0.0
  %248 = vmatpush.msra.mxu0 0.0
  %249 = vmatpush.msra.mxu0 %v206
  %250 = vmatmul.f32.gmra.mxu0 %v212
  %v251 = vpop.f32.mrf.mxu0
  %v252 = vadd.f32 0.0, %v251
  %253 = vdwg.mxu0
  %254 = vmatpush.msra.mxu0 0.0
  %255 = vmatpush.msra.mxu0 0.0
  %256 = vmatpush.msra.mxu0 0.0
  %257 = vmatpush.msra.mxu0 0.0
  %258 = vmatpush.msra.mxu0 0.0
  %259 = vmatpush.msra.mxu0 0.0
  %260 = vmatpush.msra.mxu0 0.0
  %261 = vmatpush.msra.mxu0 0.0
  %262 = vmatpush.msra.mxu0 0.0
  %263 = vmatpush.msra.mxu0 0.0
  %264 = vmatpush.msra.mxu0 0.0
  %265 = vmatpush.msra.mxu0 0.0
  %266 = vmatpush.msra.mxu0 0.0
  %267 = vmatpush.msra.mxu0 0.0
  %268 = vmatpush.msra.mxu0 0.0
  %269 = vmatpush.msra.mxu0 %v207
  %270 = vmatmul.f32.gmra.mxu0 %v212
  %v271 = vpop.f32.mrf.mxu0
  %v272 = vadd.f32 0.0, %v271
  %273 = vdwg.mxu0
  %274 = vmatpush.msra.mxu0 0.0
  %275 = vmatpush.msra.mxu0 0.0
  %276 = vmatpush.msra.mxu0 0.0
  %277 = vmatpush.msra.mxu0 0.0
  %278 = vmatpush.msra.mxu0 0.0
  %279 = vmatpush.msra.mxu0 0.0
  %280 = vmatpush.msra.mxu0 0.0
  %281 = vmatpush.msra.mxu0 0.0
  %282 = vmatpush.msra.mxu0 0.0
  %283 = vmatpush.msra.mxu0 0.0
  %284 = vmatpush.msra.mxu0 0.0
  %285 = vmatpush.msra.mxu0 0.0
  %286 = vmatpush.msra.mxu0 0.0
  %287 = vmatpush.msra.mxu0 0.0
  %288 = vmatpush.msra.mxu0 0.0
  %289 = vmatpush.msra.mxu0 %v208
  %290 = vmatmul.f32.gmra.mxu0 %v212
  %v291 = vpop.f32.mrf.mxu0
  %v292 = vadd.f32 0.0, %v291
  %293 = vdwg.mxu0
  %v295 = vsel %vm210, %v179, 0
  %297 = vmatpush.msra.mxu0 0.0
  %298 = vmatpush.msra.mxu0 0.0
  %299 = vmatpush.msra.mxu0 0.0
  %300 = vmatpush.msra.mxu0 0.0
  %301 = vmatpush.msra.mxu0 0.0
  %302 = vmatpush.msra.mxu0 0.0
  %303 = vmatpush.msra.mxu0 0.0
  %304 = vmatpush.msra.mxu0 0.0
  %305 = vmatpush.msra.mxu0 0.0
  %306 = vmatpush.msra.mxu0 0.0
  %307 = vmatpush.msra.mxu0 0.0
  %308 = vmatpush.msra.mxu0 0.0
  %309 = vmatpush.msra.mxu0 0.0
  %310 = vmatpush.msra.mxu0 0.0
  %311 = vmatpush.msra.mxu0 0.0
  %312 = vmatpush.msra.mxu0 %v174
  %313 = vmatmul.f32.gmra.mxu0 %v295
  %v314 = vpop.f32.mrf.mxu0
  %v315 = vadd.f32 %v232, %v314
  %316 = vdwg.mxu0
  %317 = vmatpush.msra.mxu0 0.0
  %318 = vmatpush.msra.mxu0 0.0
  %319 = vmatpush.msra.mxu0 0.0
  %320 = vmatpush.msra.mxu0 0.0
  %321 = vmatpush.msra.mxu0 0.0
  %322 = vmatpush.msra.mxu0 0.0
  %323 = vmatpush.msra.mxu0 0.0
  %324 = vmatpush.msra.mxu0 0.0
  %325 = vmatpush.msra.mxu0 0.0
  %326 = vmatpush.msra.mxu0 0.0
  %327 = vmatpush.msra.mxu0 0.0
  %328 = vmatpush.msra.mxu0 0.0
  %329 = vmatpush.msra.mxu0 0.0
  %330 = vmatpush.msra.mxu0 0.0
  %331 = vmatpush.msra.mxu0 0.0
  %332 = vmatpush.msra.mxu0 %v175
  %333 = vmatmul.f32.gmra.mxu0 %v295
  %v334 = vpop.f32.mrf.mxu0
  %v335 = vadd.f32 %v252, %v334
  %336 = vdwg.mxu0
  %337 = vmatpush.msra.mxu0 0.0
  %338 = vmatpush.msra.mxu0 0.0
  %339 = vmatpush.msra.mxu0 0.0
  %340 = vmatpush.msra.mxu0 0.0
  %341 = vmatpush.msra.mxu0 0.0
  %342 = vmatpush.msra.mxu0 0.0
  %343 = vmatpush.msra.mxu0 0.0
  %344 = vmatpush.msra.mxu0 0.0
  %345 = vmatpush.msra.mxu0 0.0
  %346 = vmatpush.msra.mxu0 0.0
  %347 = vmatpush.msra.mxu0 0.0
  %348 = vmatpush.msra.mxu0 0.0
  %349 = vmatpush.msra.mxu0 0.0
  %350 = vmatpush.msra.mxu0 0.0
  %351 = vmatpush.msra.mxu0 0.0
  %352 = vmatpush.msra.mxu0 %v176
  %353 = vmatmul.f32.gmra.mxu0 %v295
  %v354 = vpop.f32.mrf.mxu0
  %v355 = vadd.f32 %v272, %v354
  %356 = vdwg.mxu0
  %357 = vmatpush.msra.mxu0 0.0
  %358 = vmatpush.msra.mxu0 0.0
  %359 = vmatpush.msra.mxu0 0.0
  %360 = vmatpush.msra.mxu0 0.0
  %361 = vmatpush.msra.mxu0 0.0
  %362 = vmatpush.msra.mxu0 0.0
  %363 = vmatpush.msra.mxu0 0.0
  %364 = vmatpush.msra.mxu0 0.0
  %365 = vmatpush.msra.mxu0 0.0
  %366 = vmatpush.msra.mxu0 0.0
  %367 = vmatpush.msra.mxu0 0.0
  %368 = vmatpush.msra.mxu0 0.0
  %369 = vmatpush.msra.mxu0 0.0
  %370 = vmatpush.msra.mxu0 0.0
  %371 = vmatpush.msra.mxu0 0.0
  %372 = vmatpush.msra.mxu0 %v177
  %373 = vmatmul.f32.gmra.mxu0 %v295
  %v374 = vpop.f32.mrf.mxu0
  %v375 = vadd.f32 %v292, %v374
  %376 = vdwg.mxu0
  %377 = vrot.lane.b32.xlu0 %v174, 16
  %v378 = vpop.permute.xlu0 %377
  %379 = vrot.lane.b32.xlu0 %v175, 16
  %v380 = vpop.permute.xlu0 %379
  %381 = vrot.lane.b32.xlu0 %v176, 16
  %v382 = vpop.permute.xlu0 %381
  %383 = vrot.lane.b32.xlu0 %v177, 16
  %v384 = vpop.permute.xlu0 %383
  %vm385 = vcmp.lt.s32.totalorder %v189, 16
  %v386 = vsel %vm385, %v382, %v384
  %v387 = vsel %vm385, %v380, %v382
  %v388 = vsel %vm385, %v378, %v380
  %v389 = vsel %vm385, %v384, %v378
  %s390 = scalar_lea.vmem %s4, 1
  %v391 = vld [vmem:[%s390] ss:$8 sm:$0xf]
  %v393 = vperm.slane %v391, 0
  %v394 = vperm.slane %v391, 1
  %v395 = vperm.slane %v391, 2
  %v396 = vperm.slane %v391, 3
  %v401 = vmul.f32 %v389, %v393
  %v402 = vmul.f32 %v388, %v394
  %v403 = vmul.f32 %v387, %v395
  %v404 = vmul.f32 %v386, %v396
  %s405 = scalar_lea.vmem %s2, 8
  %v406 = vld [vmem:[%s405] sm:$0xff]
  %v408 = vsel %vm210, %v406, 0
  %410 = vmatpush.msra.mxu0 0.0
  %411 = vmatpush.msra.mxu0 0.0
  %412 = vmatpush.msra.mxu0 0.0
  %413 = vmatpush.msra.mxu0 0.0
  %414 = vmatpush.msra.mxu0 0.0
  %415 = vmatpush.msra.mxu0 0.0
  %416 = vmatpush.msra.mxu0 0.0
  %417 = vmatpush.msra.mxu0 0.0
  %418 = vmatpush.msra.mxu0 0.0
  %419 = vmatpush.msra.mxu0 0.0
  %420 = vmatpush.msra.mxu0 0.0
  %421 = vmatpush.msra.mxu0 0.0
  %422 = vmatpush.msra.mxu0 0.0
  %423 = vmatpush.msra.mxu0 0.0
  %424 = vmatpush.msra.mxu0 0.0
  %425 = vmatpush.msra.mxu0 %v401
  %426 = vmatmul.f32.gmra.mxu0 %v408
  %v427 = vpop.f32.mrf.mxu0
  %v428 = vadd.f32 0.0, %v427
  %429 = vdwg.mxu0
  %430 = vmatpush.msra.mxu0 0.0
  %431 = vmatpush.msra.mxu0 0.0
  %432 = vmatpush.msra.mxu0 0.0
  %433 = vmatpush.msra.mxu0 0.0
  %434 = vmatpush.msra.mxu0 0.0
  %435 = vmatpush.msra.mxu0 0.0
  %436 = vmatpush.msra.mxu0 0.0
  %437 = vmatpush.msra.mxu0 0.0
  %438 = vmatpush.msra.mxu0 0.0
  %439 = vmatpush.msra.mxu0 0.0
  %440 = vmatpush.msra.mxu0 0.0
  %441 = vmatpush.msra.mxu0 0.0
  %442 = vmatpush.msra.mxu0 0.0
  %443 = vmatpush.msra.mxu0 0.0
  %444 = vmatpush.msra.mxu0 0.0
  %445 = vmatpush.msra.mxu0 %v402
  %446 = vmatmul.f32.gmra.mxu0 %v408
  %v447 = vpop.f32.mrf.mxu0
  %v448 = vadd.f32 0.0, %v447
  %449 = vdwg.mxu0
  %450 = vmatpush.msra.mxu0 0.0
  %451 = vmatpush.msra.mxu0 0.0
  %452 = vmatpush.msra.mxu0 0.0
  %453 = vmatpush.msra.mxu0 0.0
  %454 = vmatpush.msra.mxu0 0.0
  %455 = vmatpush.msra.mxu0 0.0
  %456 = vmatpush.msra.mxu0 0.0
  %457 = vmatpush.msra.mxu0 0.0
  %458 = vmatpush.msra.mxu0 0.0
  %459 = vmatpush.msra.mxu0 0.0
  %460 = vmatpush.msra.mxu0 0.0
  %461 = vmatpush.msra.mxu0 0.0
  %462 = vmatpush.msra.mxu0 0.0
  %463 = vmatpush.msra.mxu0 0.0
  %464 = vmatpush.msra.mxu0 0.0
  %465 = vmatpush.msra.mxu0 %v403
  %466 = vmatmul.f32.gmra.mxu0 %v408
  %v467 = vpop.f32.mrf.mxu0
  %v468 = vadd.f32 0.0, %v467
  %469 = vdwg.mxu0
  %470 = vmatpush.msra.mxu0 0.0
  %471 = vmatpush.msra.mxu0 0.0
  %472 = vmatpush.msra.mxu0 0.0
  %473 = vmatpush.msra.mxu0 0.0
  %474 = vmatpush.msra.mxu0 0.0
  %475 = vmatpush.msra.mxu0 0.0
  %476 = vmatpush.msra.mxu0 0.0
  %477 = vmatpush.msra.mxu0 0.0
  %478 = vmatpush.msra.mxu0 0.0
  %479 = vmatpush.msra.mxu0 0.0
  %480 = vmatpush.msra.mxu0 0.0
  %481 = vmatpush.msra.mxu0 0.0
  %482 = vmatpush.msra.mxu0 0.0
  %483 = vmatpush.msra.mxu0 0.0
  %484 = vmatpush.msra.mxu0 0.0
  %485 = vmatpush.msra.mxu0 %v404
  %486 = vmatmul.f32.gmra.mxu0 %v408
  %v487 = vpop.f32.mrf.mxu0
  %v488 = vadd.f32 0.0, %v487
  %489 = vdwg.mxu0
  %v490 = vadd.f32 %v315, %v428
  %v491 = vadd.f32 %v335, %v448
  %v492 = vadd.f32 %v355, %v468
  %v493 = vadd.f32 %v375, %v488
  %494 = vrot.lane.b32.xlu0 %v174, 15
  %v495 = vpop.permute.xlu0 %494
  %496 = vrot.lane.b32.xlu0 %v175, 15
  %v497 = vpop.permute.xlu0 %496
  %498 = vrot.lane.b32.xlu0 %v176, 15
  %v499 = vpop.permute.xlu0 %498
  %500 = vrot.lane.b32.xlu0 %v177, 15
  %v501 = vpop.permute.xlu0 %500
  %vm502 = vcmp.lt.s32.totalorder %v189, 15
  %v503 = vsel %vm502, %v499, %v501
  %v504 = vsel %vm502, %v497, %v499
  %v505 = vsel %vm502, %v495, %v497
  %v506 = vsel %vm502, %v501, %v495
  %s507 = scalar_lea.vmem %s4, 2
  %v508 = vld [vmem:[%s507] ss:$8 sm:$0xf]
  %v510 = vperm.slane %v508, 0
  %v511 = vperm.slane %v508, 1
  %v512 = vperm.slane %v508, 2
  %v513 = vperm.slane %v508, 3
  %v518 = vmul.f32 %v506, %v510
  %v519 = vmul.f32 %v505, %v511
  %v520 = vmul.f32 %v504, %v512
  %v521 = vmul.f32 %v503, %v513
  %s522 = scalar_lea.vmem %s2, 16
  %v523 = vld [vmem:[%s522] sm:$0xff]
  %v525 = vsel %vm210, %v523, 0
  %527 = vmatpush.msra.mxu0 0.0
  %528 = vmatpush.msra.mxu0 0.0
  %529 = vmatpush.msra.mxu0 0.0
  %530 = vmatpush.msra.mxu0 0.0
  %531 = vmatpush.msra.mxu0 0.0
  %532 = vmatpush.msra.mxu0 0.0
  %533 = vmatpush.msra.mxu0 0.0
  %534 = vmatpush.msra.mxu0 0.0
  %535 = vmatpush.msra.mxu0 0.0
  %536 = vmatpush.msra.mxu0 0.0
  %537 = vmatpush.msra.mxu0 0.0
  %538 = vmatpush.msra.mxu0 0.0
  %539 = vmatpush.msra.mxu0 0.0
  %540 = vmatpush.msra.mxu0 0.0
  %541 = vmatpush.msra.mxu0 0.0
  %542 = vmatpush.msra.mxu0 %v518
  %543 = vmatmul.f32.gmra.mxu0 %v525
  %v544 = vpop.f32.mrf.mxu0
  %v545 = vadd.f32 0.0, %v544
  %546 = vdwg.mxu0
  %547 = vmatpush.msra.mxu0 0.0
  %548 = vmatpush.msra.mxu0 0.0
  %549 = vmatpush.msra.mxu0 0.0
  %550 = vmatpush.msra.mxu0 0.0
  %551 = vmatpush.msra.mxu0 0.0
  %552 = vmatpush.msra.mxu0 0.0
  %553 = vmatpush.msra.mxu0 0.0
  %554 = vmatpush.msra.mxu0 0.0
  %555 = vmatpush.msra.mxu0 0.0
  %556 = vmatpush.msra.mxu0 0.0
  %557 = vmatpush.msra.mxu0 0.0
  %558 = vmatpush.msra.mxu0 0.0
  %559 = vmatpush.msra.mxu0 0.0
  %560 = vmatpush.msra.mxu0 0.0
  %561 = vmatpush.msra.mxu0 0.0
  %562 = vmatpush.msra.mxu0 %v519
  %563 = vmatmul.f32.gmra.mxu0 %v525
  %v564 = vpop.f32.mrf.mxu0
  %v565 = vadd.f32 0.0, %v564
  %566 = vdwg.mxu0
  %567 = vmatpush.msra.mxu0 0.0
  %568 = vmatpush.msra.mxu0 0.0
  %569 = vmatpush.msra.mxu0 0.0
  %570 = vmatpush.msra.mxu0 0.0
  %571 = vmatpush.msra.mxu0 0.0
  %572 = vmatpush.msra.mxu0 0.0
  %573 = vmatpush.msra.mxu0 0.0
  %574 = vmatpush.msra.mxu0 0.0
  %575 = vmatpush.msra.mxu0 0.0
  %576 = vmatpush.msra.mxu0 0.0
  %577 = vmatpush.msra.mxu0 0.0
  %578 = vmatpush.msra.mxu0 0.0
  %579 = vmatpush.msra.mxu0 0.0
  %580 = vmatpush.msra.mxu0 0.0
  %581 = vmatpush.msra.mxu0 0.0
  %582 = vmatpush.msra.mxu0 %v520
  %583 = vmatmul.f32.gmra.mxu0 %v525
  %v584 = vpop.f32.mrf.mxu0
  %v585 = vadd.f32 0.0, %v584
  %586 = vdwg.mxu0
  %587 = vmatpush.msra.mxu0 0.0
  %588 = vmatpush.msra.mxu0 0.0
  %589 = vmatpush.msra.mxu0 0.0
  %590 = vmatpush.msra.mxu0 0.0
  %591 = vmatpush.msra.mxu0 0.0
  %592 = vmatpush.msra.mxu0 0.0
  %593 = vmatpush.msra.mxu0 0.0
  %594 = vmatpush.msra.mxu0 0.0
  %595 = vmatpush.msra.mxu0 0.0
  %596 = vmatpush.msra.mxu0 0.0
  %597 = vmatpush.msra.mxu0 0.0
  %598 = vmatpush.msra.mxu0 0.0
  %599 = vmatpush.msra.mxu0 0.0
  %600 = vmatpush.msra.mxu0 0.0
  %601 = vmatpush.msra.mxu0 0.0
  %602 = vmatpush.msra.mxu0 %v521
  %603 = vmatmul.f32.gmra.mxu0 %v525
  %v604 = vpop.f32.mrf.mxu0
  %v605 = vadd.f32 0.0, %v604
  %606 = vdwg.mxu0
  %v607 = vadd.f32 %v490, %v545
  %v608 = vadd.f32 %v491, %v565
  %v609 = vadd.f32 %v492, %v585
  %v610 = vadd.f32 %v493, %v605
  %611 = vrot.lane.b32.xlu0 %v174, 1
  %v612 = vpop.permute.xlu0 %611
  %613 = vrot.lane.b32.xlu0 %v175, 1
  %v614 = vpop.permute.xlu0 %613
  %615 = vrot.lane.b32.xlu0 %v176, 1
  %v616 = vpop.permute.xlu0 %615
  %617 = vrot.lane.b32.xlu0 %v177, 1
  %v618 = vpop.permute.xlu0 %617
  %vm619 = vcmp.lt.s32.totalorder %v189, 1
  %v620 = vsel %vm619, %v616, %v618
  %v621 = vsel %vm619, %v614, %v616
  %v622 = vsel %vm619, %v612, %v614
  %v623 = vsel %vm619, %v618, %v612
  %s624 = scalar_lea.vmem %s4, 3
  %v625 = vld [vmem:[%s624] ss:$8 sm:$0xf]
  %v627 = vperm.slane %v625, 0
  %v628 = vperm.slane %v625, 1
  %v629 = vperm.slane %v625, 2
  %v630 = vperm.slane %v625, 3
  %v635 = vmul.f32 %v623, %v627
  %v636 = vmul.f32 %v622, %v628
  %v637 = vmul.f32 %v621, %v629
  %v638 = vmul.f32 %v620, %v630
  %s639 = scalar_lea.vmem %s2, 24
  %v640 = vld [vmem:[%s639] sm:$0xff]
  %v642 = vsel %vm210, %v640, 0
  %644 = vmatpush.msra.mxu0 0.0
  %645 = vmatpush.msra.mxu0 0.0
  %646 = vmatpush.msra.mxu0 0.0
  %647 = vmatpush.msra.mxu0 0.0
  %648 = vmatpush.msra.mxu0 0.0
  %649 = vmatpush.msra.mxu0 0.0
  %650 = vmatpush.msra.mxu0 0.0
  %651 = vmatpush.msra.mxu0 0.0
  %652 = vmatpush.msra.mxu0 0.0
  %653 = vmatpush.msra.mxu0 0.0
  %654 = vmatpush.msra.mxu0 0.0
  %655 = vmatpush.msra.mxu0 0.0
  %656 = vmatpush.msra.mxu0 0.0
  %657 = vmatpush.msra.mxu0 0.0
  %658 = vmatpush.msra.mxu0 0.0
  %659 = vmatpush.msra.mxu0 %v635
  %660 = vmatmul.f32.gmra.mxu0 %v642
  %v661 = vpop.f32.mrf.mxu0
  %v662 = vadd.f32 0.0, %v661
  %663 = vdwg.mxu0
  %664 = vmatpush.msra.mxu0 0.0
  %665 = vmatpush.msra.mxu0 0.0
  %666 = vmatpush.msra.mxu0 0.0
  %667 = vmatpush.msra.mxu0 0.0
  %668 = vmatpush.msra.mxu0 0.0
  %669 = vmatpush.msra.mxu0 0.0
  %670 = vmatpush.msra.mxu0 0.0
  %671 = vmatpush.msra.mxu0 0.0
  %672 = vmatpush.msra.mxu0 0.0
  %673 = vmatpush.msra.mxu0 0.0
  %674 = vmatpush.msra.mxu0 0.0
  %675 = vmatpush.msra.mxu0 0.0
  %676 = vmatpush.msra.mxu0 0.0
  %677 = vmatpush.msra.mxu0 0.0
  %678 = vmatpush.msra.mxu0 0.0
  %679 = vmatpush.msra.mxu0 %v636
  %680 = vmatmul.f32.gmra.mxu0 %v642
  %v681 = vpop.f32.mrf.mxu0
  %v682 = vadd.f32 0.0, %v681
  %683 = vdwg.mxu0
  %684 = vmatpush.msra.mxu0 0.0
  %685 = vmatpush.msra.mxu0 0.0
  %686 = vmatpush.msra.mxu0 0.0
  %687 = vmatpush.msra.mxu0 0.0
  %688 = vmatpush.msra.mxu0 0.0
  %689 = vmatpush.msra.mxu0 0.0
  %690 = vmatpush.msra.mxu0 0.0
  %691 = vmatpush.msra.mxu0 0.0
  %692 = vmatpush.msra.mxu0 0.0
  %693 = vmatpush.msra.mxu0 0.0
  %694 = vmatpush.msra.mxu0 0.0
  %695 = vmatpush.msra.mxu0 0.0
  %696 = vmatpush.msra.mxu0 0.0
  %697 = vmatpush.msra.mxu0 0.0
  %698 = vmatpush.msra.mxu0 0.0
  %699 = vmatpush.msra.mxu0 %v637
  %700 = vmatmul.f32.gmra.mxu0 %v642
  %v701 = vpop.f32.mrf.mxu0
  %v702 = vadd.f32 0.0, %v701
  %703 = vdwg.mxu0
  %704 = vmatpush.msra.mxu0 0.0
  %705 = vmatpush.msra.mxu0 0.0
  %706 = vmatpush.msra.mxu0 0.0
  %707 = vmatpush.msra.mxu0 0.0
  %708 = vmatpush.msra.mxu0 0.0
  %709 = vmatpush.msra.mxu0 0.0
  %710 = vmatpush.msra.mxu0 0.0
  %711 = vmatpush.msra.mxu0 0.0
  %712 = vmatpush.msra.mxu0 0.0
  %713 = vmatpush.msra.mxu0 0.0
  %714 = vmatpush.msra.mxu0 0.0
  %715 = vmatpush.msra.mxu0 0.0
  %716 = vmatpush.msra.mxu0 0.0
  %717 = vmatpush.msra.mxu0 0.0
  %718 = vmatpush.msra.mxu0 0.0
  %719 = vmatpush.msra.mxu0 %v638
  %720 = vmatmul.f32.gmra.mxu0 %v642
  %v721 = vpop.f32.mrf.mxu0
  %v722 = vadd.f32 0.0, %v721
  %723 = vdwg.mxu0
  %v724 = vadd.f32 %v607, %v662
  %v725 = vadd.f32 %v608, %v682
  %v726 = vadd.f32 %v609, %v702
  %v727 = vadd.f32 %v610, %v722
  %728 = vrot.lane.b32.xlu0 %v174, 127
  %v729 = vpop.permute.xlu0 %728
  %730 = vrot.lane.b32.xlu0 %v175, 127
  %v731 = vpop.permute.xlu0 %730
  %732 = vrot.lane.b32.xlu0 %v176, 127
  %v733 = vpop.permute.xlu0 %732
  %734 = vrot.lane.b32.xlu0 %v177, 127
  %v735 = vpop.permute.xlu0 %734
  %vm736 = vcmp.lt.s32.totalorder %v189, 127
  %v737 = vsel %vm736, %v733, %v735
  %v738 = vsel %vm736, %v731, %v733
  %v739 = vsel %vm736, %v729, %v731
  %v740 = vsel %vm736, %v735, %v729
  %s741 = scalar_lea.vmem %s4, 5
  %v742 = vld [vmem:[%s741] ss:$8 sm:$0xf]
  %v744 = vperm.slane %v742, 0
  %v745 = vperm.slane %v742, 1
  %v746 = vperm.slane %v742, 2
  %v747 = vperm.slane %v742, 3
  %v752 = vmul.f32 %v739, %v744
  %v753 = vmul.f32 %v738, %v745
  %v754 = vmul.f32 %v737, %v746
  %v755 = vmul.f32 %v740, %v747
  %s756 = scalar_lea.vmem %s2, 40
  %v757 = vld [vmem:[%s756] sm:$0xff]
  %v759 = vsel %vm210, %v757, 0
  %761 = vmatpush.msra.mxu0 0.0
  %762 = vmatpush.msra.mxu0 0.0
  %763 = vmatpush.msra.mxu0 0.0
  %764 = vmatpush.msra.mxu0 0.0
  %765 = vmatpush.msra.mxu0 0.0
  %766 = vmatpush.msra.mxu0 0.0
  %767 = vmatpush.msra.mxu0 0.0
  %768 = vmatpush.msra.mxu0 0.0
  %769 = vmatpush.msra.mxu0 0.0
  %770 = vmatpush.msra.mxu0 0.0
  %771 = vmatpush.msra.mxu0 0.0
  %772 = vmatpush.msra.mxu0 0.0
  %773 = vmatpush.msra.mxu0 0.0
  %774 = vmatpush.msra.mxu0 0.0
  %775 = vmatpush.msra.mxu0 0.0
  %776 = vmatpush.msra.mxu0 %v752
  %777 = vmatmul.f32.gmra.mxu0 %v759
  %v778 = vpop.f32.mrf.mxu0
  %v779 = vadd.f32 0.0, %v778
  %780 = vdwg.mxu0
  %781 = vmatpush.msra.mxu0 0.0
  %782 = vmatpush.msra.mxu0 0.0
  %783 = vmatpush.msra.mxu0 0.0
  %784 = vmatpush.msra.mxu0 0.0
  %785 = vmatpush.msra.mxu0 0.0
  %786 = vmatpush.msra.mxu0 0.0
  %787 = vmatpush.msra.mxu0 0.0
  %788 = vmatpush.msra.mxu0 0.0
  %789 = vmatpush.msra.mxu0 0.0
  %790 = vmatpush.msra.mxu0 0.0
  %791 = vmatpush.msra.mxu0 0.0
  %792 = vmatpush.msra.mxu0 0.0
  %793 = vmatpush.msra.mxu0 0.0
  %794 = vmatpush.msra.mxu0 0.0
  %795 = vmatpush.msra.mxu0 0.0
  %796 = vmatpush.msra.mxu0 %v753
  %797 = vmatmul.f32.gmra.mxu0 %v759
  %v798 = vpop.f32.mrf.mxu0
  %v799 = vadd.f32 0.0, %v798
  %800 = vdwg.mxu0
  %801 = vmatpush.msra.mxu0 0.0
  %802 = vmatpush.msra.mxu0 0.0
  %803 = vmatpush.msra.mxu0 0.0
  %804 = vmatpush.msra.mxu0 0.0
  %805 = vmatpush.msra.mxu0 0.0
  %806 = vmatpush.msra.mxu0 0.0
  %807 = vmatpush.msra.mxu0 0.0
  %808 = vmatpush.msra.mxu0 0.0
  %809 = vmatpush.msra.mxu0 0.0
  %810 = vmatpush.msra.mxu0 0.0
  %811 = vmatpush.msra.mxu0 0.0
  %812 = vmatpush.msra.mxu0 0.0
  %813 = vmatpush.msra.mxu0 0.0
  %814 = vmatpush.msra.mxu0 0.0
  %815 = vmatpush.msra.mxu0 0.0
  %816 = vmatpush.msra.mxu0 %v754
  %817 = vmatmul.f32.gmra.mxu0 %v759
  %v818 = vpop.f32.mrf.mxu0
  %v819 = vadd.f32 0.0, %v818
  %820 = vdwg.mxu0
  %821 = vmatpush.msra.mxu0 0.0
  %822 = vmatpush.msra.mxu0 0.0
  %823 = vmatpush.msra.mxu0 0.0
  %824 = vmatpush.msra.mxu0 0.0
  %825 = vmatpush.msra.mxu0 0.0
  %826 = vmatpush.msra.mxu0 0.0
  %827 = vmatpush.msra.mxu0 0.0
  %828 = vmatpush.msra.mxu0 0.0
  %829 = vmatpush.msra.mxu0 0.0
  %830 = vmatpush.msra.mxu0 0.0
  %831 = vmatpush.msra.mxu0 0.0
  %832 = vmatpush.msra.mxu0 0.0
  %833 = vmatpush.msra.mxu0 0.0
  %834 = vmatpush.msra.mxu0 0.0
  %835 = vmatpush.msra.mxu0 0.0
  %836 = vmatpush.msra.mxu0 %v755
  %837 = vmatmul.f32.gmra.mxu0 %v759
  %v838 = vpop.f32.mrf.mxu0
  %v839 = vadd.f32 0.0, %v838
  %840 = vdwg.mxu0
  %v841 = vadd.f32 %v724, %v779
  %v842 = vadd.f32 %v725, %v799
  %v843 = vadd.f32 %v726, %v819
  %v844 = vadd.f32 %v727, %v839
  %845 = vrot.lane.b32.xlu0 %v174, 113
  %v846 = vpop.permute.xlu0 %845
  %847 = vrot.lane.b32.xlu0 %v175, 113
  %v848 = vpop.permute.xlu0 %847
  %849 = vrot.lane.b32.xlu0 %v176, 113
  %v850 = vpop.permute.xlu0 %849
  %851 = vrot.lane.b32.xlu0 %v177, 113
  %v852 = vpop.permute.xlu0 %851
  %vm853 = vcmp.lt.s32.totalorder %v189, 113
  %v854 = vsel %vm853, %v850, %v852
  %v855 = vsel %vm853, %v848, %v850
  %v856 = vsel %vm853, %v846, %v848
  %v857 = vsel %vm853, %v852, %v846
  %s858 = scalar_lea.vmem %s4, 6
  %v859 = vld [vmem:[%s858] ss:$8 sm:$0xf]
  %v861 = vperm.slane %v859, 0
  %v862 = vperm.slane %v859, 1
  %v863 = vperm.slane %v859, 2
  %v864 = vperm.slane %v859, 3
  %v869 = vmul.f32 %v856, %v861
  %v870 = vmul.f32 %v855, %v862
  %v871 = vmul.f32 %v854, %v863
  %v872 = vmul.f32 %v857, %v864
  %s873 = scalar_lea.vmem %s2, 48
  %v874 = vld [vmem:[%s873] sm:$0xff]
  %v876 = vsel %vm210, %v874, 0
  %878 = vmatpush.msra.mxu0 0.0
  %879 = vmatpush.msra.mxu0 0.0
  %880 = vmatpush.msra.mxu0 0.0
  %881 = vmatpush.msra.mxu0 0.0
  %882 = vmatpush.msra.mxu0 0.0
  %883 = vmatpush.msra.mxu0 0.0
  %884 = vmatpush.msra.mxu0 0.0
  %885 = vmatpush.msra.mxu0 0.0
  %886 = vmatpush.msra.mxu0 0.0
  %887 = vmatpush.msra.mxu0 0.0
  %888 = vmatpush.msra.mxu0 0.0
  %889 = vmatpush.msra.mxu0 0.0
  %890 = vmatpush.msra.mxu0 0.0
  %891 = vmatpush.msra.mxu0 0.0
  %892 = vmatpush.msra.mxu0 0.0
  %893 = vmatpush.msra.mxu0 %v869
  %894 = vmatmul.f32.gmra.mxu0 %v876
  %v895 = vpop.f32.mrf.mxu0
  %v896 = vadd.f32 0.0, %v895
  %897 = vdwg.mxu0
  %898 = vmatpush.msra.mxu0 0.0
  %899 = vmatpush.msra.mxu0 0.0
  %900 = vmatpush.msra.mxu0 0.0
  %901 = vmatpush.msra.mxu0 0.0
  %902 = vmatpush.msra.mxu0 0.0
  %903 = vmatpush.msra.mxu0 0.0
  %904 = vmatpush.msra.mxu0 0.0
  %905 = vmatpush.msra.mxu0 0.0
  %906 = vmatpush.msra.mxu0 0.0
  %907 = vmatpush.msra.mxu0 0.0
  %908 = vmatpush.msra.mxu0 0.0
  %909 = vmatpush.msra.mxu0 0.0
  %910 = vmatpush.msra.mxu0 0.0
  %911 = vmatpush.msra.mxu0 0.0
  %912 = vmatpush.msra.mxu0 0.0
  %913 = vmatpush.msra.mxu0 %v870
  %914 = vmatmul.f32.gmra.mxu0 %v876
  %v915 = vpop.f32.mrf.mxu0
  %v916 = vadd.f32 0.0, %v915
  %917 = vdwg.mxu0
  %918 = vmatpush.msra.mxu0 0.0
  %919 = vmatpush.msra.mxu0 0.0
  %920 = vmatpush.msra.mxu0 0.0
  %921 = vmatpush.msra.mxu0 0.0
  %922 = vmatpush.msra.mxu0 0.0
  %923 = vmatpush.msra.mxu0 0.0
  %924 = vmatpush.msra.mxu0 0.0
  %925 = vmatpush.msra.mxu0 0.0
  %926 = vmatpush.msra.mxu0 0.0
  %927 = vmatpush.msra.mxu0 0.0
  %928 = vmatpush.msra.mxu0 0.0
  %929 = vmatpush.msra.mxu0 0.0
  %930 = vmatpush.msra.mxu0 0.0
  %931 = vmatpush.msra.mxu0 0.0
  %932 = vmatpush.msra.mxu0 0.0
  %933 = vmatpush.msra.mxu0 %v871
  %934 = vmatmul.f32.gmra.mxu0 %v876
  %v935 = vpop.f32.mrf.mxu0
  %v936 = vadd.f32 0.0, %v935
  %937 = vdwg.mxu0
  %938 = vmatpush.msra.mxu0 0.0
  %939 = vmatpush.msra.mxu0 0.0
  %940 = vmatpush.msra.mxu0 0.0
  %941 = vmatpush.msra.mxu0 0.0
  %942 = vmatpush.msra.mxu0 0.0
  %943 = vmatpush.msra.mxu0 0.0
  %944 = vmatpush.msra.mxu0 0.0
  %945 = vmatpush.msra.mxu0 0.0
  %946 = vmatpush.msra.mxu0 0.0
  %947 = vmatpush.msra.mxu0 0.0
  %948 = vmatpush.msra.mxu0 0.0
  %949 = vmatpush.msra.mxu0 0.0
  %950 = vmatpush.msra.mxu0 0.0
  %951 = vmatpush.msra.mxu0 0.0
  %952 = vmatpush.msra.mxu0 0.0
  %953 = vmatpush.msra.mxu0 %v872
  %954 = vmatmul.f32.gmra.mxu0 %v876
  %v955 = vpop.f32.mrf.mxu0
  %v956 = vadd.f32 0.0, %v955
  %957 = vdwg.mxu0
  %v958 = vadd.f32 %v841, %v896
  %v959 = vadd.f32 %v842, %v916
  %v960 = vadd.f32 %v843, %v936
  %v961 = vadd.f32 %v844, %v956
  %962 = vrot.lane.b32.xlu0 %v174, 112
  %v963 = vpop.permute.xlu0 %962
  %964 = vrot.lane.b32.xlu0 %v175, 112
  %v965 = vpop.permute.xlu0 %964
  %966 = vrot.lane.b32.xlu0 %v176, 112
  %v967 = vpop.permute.xlu0 %966
  %968 = vrot.lane.b32.xlu0 %v177, 112
  %v969 = vpop.permute.xlu0 %968
  %vm970 = vcmp.lt.s32.totalorder %v189, 112
  %v971 = vsel %vm970, %v967, %v969
  %v972 = vsel %vm970, %v965, %v967
  %v973 = vsel %vm970, %v963, %v965
  %v974 = vsel %vm970, %v969, %v963
  %s975 = scalar_lea.vmem %s4, 7
  %v976 = vld [vmem:[%s975] ss:$8 sm:$0xf]
  %v978 = vperm.slane %v976, 0
  %v979 = vperm.slane %v976, 1
  %v980 = vperm.slane %v976, 2
  %v981 = vperm.slane %v976, 3
  %v986 = vmul.f32 %v973, %v978
  %v987 = vmul.f32 %v972, %v979
  %v988 = vmul.f32 %v971, %v980
  %v989 = vmul.f32 %v974, %v981
  %s990 = scalar_lea.vmem %s2, 56
  %v991 = vld [vmem:[%s990] sm:$0xff]
  %v993 = vsel %vm210, %v991, 0
  %995 = vmatpush.msra.mxu0 0.0
  %996 = vmatpush.msra.mxu0 0.0
  %997 = vmatpush.msra.mxu0 0.0
  %998 = vmatpush.msra.mxu0 0.0
  %999 = vmatpush.msra.mxu0 0.0
  %1000 = vmatpush.msra.mxu0 0.0
  %1001 = vmatpush.msra.mxu0 0.0
  %1002 = vmatpush.msra.mxu0 0.0
  %1003 = vmatpush.msra.mxu0 0.0
  %1004 = vmatpush.msra.mxu0 0.0
  %1005 = vmatpush.msra.mxu0 0.0
  %1006 = vmatpush.msra.mxu0 0.0
  %1007 = vmatpush.msra.mxu0 0.0
  %1008 = vmatpush.msra.mxu0 0.0
  %1009 = vmatpush.msra.mxu0 0.0
  %1010 = vmatpush.msra.mxu0 %v986
  %1011 = vmatmul.f32.gmra.mxu0 %v993
  %v1012 = vpop.f32.mrf.mxu0
  %v1013 = vadd.f32 0.0, %v1012
  %1014 = vdwg.mxu0
  %1015 = vmatpush.msra.mxu0 0.0
  %1016 = vmatpush.msra.mxu0 0.0
  %1017 = vmatpush.msra.mxu0 0.0
  %1018 = vmatpush.msra.mxu0 0.0
  %1019 = vmatpush.msra.mxu0 0.0
  %1020 = vmatpush.msra.mxu0 0.0
  %1021 = vmatpush.msra.mxu0 0.0
  %1022 = vmatpush.msra.mxu0 0.0
  %1023 = vmatpush.msra.mxu0 0.0
  %1024 = vmatpush.msra.mxu0 0.0
  %1025 = vmatpush.msra.mxu0 0.0
  %1026 = vmatpush.msra.mxu0 0.0
  %1027 = vmatpush.msra.mxu0 0.0
  %1028 = vmatpush.msra.mxu0 0.0
  %1029 = vmatpush.msra.mxu0 0.0
  %1030 = vmatpush.msra.mxu0 %v987
  %1031 = vmatmul.f32.gmra.mxu0 %v993
  %v1032 = vpop.f32.mrf.mxu0
  %v1033 = vadd.f32 0.0, %v1032
  %1034 = vdwg.mxu0
  %1035 = vmatpush.msra.mxu0 0.0
  %1036 = vmatpush.msra.mxu0 0.0
  %1037 = vmatpush.msra.mxu0 0.0
  %1038 = vmatpush.msra.mxu0 0.0
  %1039 = vmatpush.msra.mxu0 0.0
  %1040 = vmatpush.msra.mxu0 0.0
  %1041 = vmatpush.msra.mxu0 0.0
  %1042 = vmatpush.msra.mxu0 0.0
  %1043 = vmatpush.msra.mxu0 0.0
  %1044 = vmatpush.msra.mxu0 0.0
  %1045 = vmatpush.msra.mxu0 0.0
  %1046 = vmatpush.msra.mxu0 0.0
  %1047 = vmatpush.msra.mxu0 0.0
  %1048 = vmatpush.msra.mxu0 0.0
  %1049 = vmatpush.msra.mxu0 0.0
  %1050 = vmatpush.msra.mxu0 %v988
  %1051 = vmatmul.f32.gmra.mxu0 %v993
  %v1052 = vpop.f32.mrf.mxu0
  %v1053 = vadd.f32 0.0, %v1052
  %1054 = vdwg.mxu0
  %1055 = vmatpush.msra.mxu0 0.0
  %1056 = vmatpush.msra.mxu0 0.0
  %1057 = vmatpush.msra.mxu0 0.0
  %1058 = vmatpush.msra.mxu0 0.0
  %1059 = vmatpush.msra.mxu0 0.0
  %1060 = vmatpush.msra.mxu0 0.0
  %1061 = vmatpush.msra.mxu0 0.0
  %1062 = vmatpush.msra.mxu0 0.0
  %1063 = vmatpush.msra.mxu0 0.0
  %1064 = vmatpush.msra.mxu0 0.0
  %1065 = vmatpush.msra.mxu0 0.0
  %1066 = vmatpush.msra.mxu0 0.0
  %1067 = vmatpush.msra.mxu0 0.0
  %1068 = vmatpush.msra.mxu0 0.0
  %1069 = vmatpush.msra.mxu0 0.0
  %1070 = vmatpush.msra.mxu0 %v989
  %1071 = vmatmul.f32.gmra.mxu0 %v993
  %v1072 = vpop.f32.mrf.mxu0
  %v1073 = vadd.f32 0.0, %v1072
  %1074 = vdwg.mxu0
  %v1075 = vadd.f32 %v958, %v1013
  %v1076 = vadd.f32 %v959, %v1033
  %v1077 = vadd.f32 %v960, %v1053
  %v1078 = vadd.f32 %v961, %v1073
  %1079 = vrot.lane.b32.xlu0 %v174, 111
  %v1080 = vpop.permute.xlu0 %1079
  %1081 = vrot.lane.b32.xlu0 %v175, 111
  %v1082 = vpop.permute.xlu0 %1081
  %1083 = vrot.lane.b32.xlu0 %v176, 111
  %v1084 = vpop.permute.xlu0 %1083
  %1085 = vrot.lane.b32.xlu0 %v177, 111
  %v1086 = vpop.permute.xlu0 %1085
  %vm1087 = vcmp.lt.s32.totalorder %v189, 111
  %v1088 = vsel %vm1087, %v1084, %v1086
  %v1089 = vsel %vm1087, %v1082, %v1084
  %v1090 = vsel %vm1087, %v1080, %v1082
  %v1091 = vsel %vm1087, %v1086, %v1080
  %s1092 = scalar_lea.vmem %s4, 32
  %v1093 = vld [vmem:[%s1092] ss:$8 sm:$0xf]
  %v1095 = vperm.slane %v1093, 0
  %v1096 = vperm.slane %v1093, 1
  %v1097 = vperm.slane %v1093, 2
  %v1098 = vperm.slane %v1093, 3
  %v1103 = vmul.f32 %v1090, %v1095
  %v1104 = vmul.f32 %v1089, %v1096
  %v1105 = vmul.f32 %v1088, %v1097
  %v1106 = vmul.f32 %v1091, %v1098
  %s1107 = scalar_lea.vmem %s2, 64
  %v1108 = vld [vmem:[%s1107] sm:$0xff]
  %v1110 = vsel %vm210, %v1108, 0
  %1112 = vmatpush.msra.mxu0 0.0
  %1113 = vmatpush.msra.mxu0 0.0
  %1114 = vmatpush.msra.mxu0 0.0
  %1115 = vmatpush.msra.mxu0 0.0
  %1116 = vmatpush.msra.mxu0 0.0
  %1117 = vmatpush.msra.mxu0 0.0
  %1118 = vmatpush.msra.mxu0 0.0
  %1119 = vmatpush.msra.mxu0 0.0
  %1120 = vmatpush.msra.mxu0 0.0
  %1121 = vmatpush.msra.mxu0 0.0
  %1122 = vmatpush.msra.mxu0 0.0
  %1123 = vmatpush.msra.mxu0 0.0
  %1124 = vmatpush.msra.mxu0 0.0
  %1125 = vmatpush.msra.mxu0 0.0
  %1126 = vmatpush.msra.mxu0 0.0
  %1127 = vmatpush.msra.mxu0 %v1103
  %1128 = vmatmul.f32.gmra.mxu0 %v1110
  %v1129 = vpop.f32.mrf.mxu0
  %v1130 = vadd.f32 0.0, %v1129
  %1131 = vdwg.mxu0
  %1132 = vmatpush.msra.mxu0 0.0
  %1133 = vmatpush.msra.mxu0 0.0
  %1134 = vmatpush.msra.mxu0 0.0
  %1135 = vmatpush.msra.mxu0 0.0
  %1136 = vmatpush.msra.mxu0 0.0
  %1137 = vmatpush.msra.mxu0 0.0
  %1138 = vmatpush.msra.mxu0 0.0
  %1139 = vmatpush.msra.mxu0 0.0
  %1140 = vmatpush.msra.mxu0 0.0
  %1141 = vmatpush.msra.mxu0 0.0
  %1142 = vmatpush.msra.mxu0 0.0
  %1143 = vmatpush.msra.mxu0 0.0
  %1144 = vmatpush.msra.mxu0 0.0
  %1145 = vmatpush.msra.mxu0 0.0
  %1146 = vmatpush.msra.mxu0 0.0
  %1147 = vmatpush.msra.mxu0 %v1104
  %1148 = vmatmul.f32.gmra.mxu0 %v1110
  %v1149 = vpop.f32.mrf.mxu0
  %v1150 = vadd.f32 0.0, %v1149
  %1151 = vdwg.mxu0
  %1152 = vmatpush.msra.mxu0 0.0
  %1153 = vmatpush.msra.mxu0 0.0
  %1154 = vmatpush.msra.mxu0 0.0
  %1155 = vmatpush.msra.mxu0 0.0
  %1156 = vmatpush.msra.mxu0 0.0
  %1157 = vmatpush.msra.mxu0 0.0
  %1158 = vmatpush.msra.mxu0 0.0
  %1159 = vmatpush.msra.mxu0 0.0
  %1160 = vmatpush.msra.mxu0 0.0
  %1161 = vmatpush.msra.mxu0 0.0
  %1162 = vmatpush.msra.mxu0 0.0
  %1163 = vmatpush.msra.mxu0 0.0
  %1164 = vmatpush.msra.mxu0 0.0
  %1165 = vmatpush.msra.mxu0 0.0
  %1166 = vmatpush.msra.mxu0 0.0
  %1167 = vmatpush.msra.mxu0 %v1105
  %1168 = vmatmul.f32.gmra.mxu0 %v1110
  %v1169 = vpop.f32.mrf.mxu0
  %v1170 = vadd.f32 0.0, %v1169
  %1171 = vdwg.mxu0
  %1172 = vmatpush.msra.mxu0 0.0
  %1173 = vmatpush.msra.mxu0 0.0
  %1174 = vmatpush.msra.mxu0 0.0
  %1175 = vmatpush.msra.mxu0 0.0
  %1176 = vmatpush.msra.mxu0 0.0
  %1177 = vmatpush.msra.mxu0 0.0
  %1178 = vmatpush.msra.mxu0 0.0
  %1179 = vmatpush.msra.mxu0 0.0
  %1180 = vmatpush.msra.mxu0 0.0
  %1181 = vmatpush.msra.mxu0 0.0
  %1182 = vmatpush.msra.mxu0 0.0
  %1183 = vmatpush.msra.mxu0 0.0
  %1184 = vmatpush.msra.mxu0 0.0
  %1185 = vmatpush.msra.mxu0 0.0
  %1186 = vmatpush.msra.mxu0 0.0
  %1187 = vmatpush.msra.mxu0 %v1106
  %1188 = vmatmul.f32.gmra.mxu0 %v1110
  %v1189 = vpop.f32.mrf.mxu0
  %v1190 = vadd.f32 0.0, %v1189
  %1191 = vdwg.mxu0
  %v1192 = vadd.f32 %v1075, %v1130
  %v1193 = vadd.f32 %v1076, %v1150
  %v1194 = vadd.f32 %v1077, %v1170
  %v1195 = vadd.f32 %v1078, %v1190
  %v1196 = vmul.f32 %v1192, %v116
  %v1197 = vmul.f32 %v1193, %v117
  %v1198 = vmul.f32 %v1194, %v118
  %v1199 = vmul.f32 %v1195, %v119
  %v1200 = vadd.f32 %v1196, %v1197
  %v1201 = vadd.f32 %v1200, %v1198
  %v1202 = vadd.f32 %v1201, %v1199
  %1203 = vadd.xlane.f32.xlu0 %v1202
  %v1204 = vpop.xlane.xlu0 %1203
  %v1205 = vmul.f32 %v1204, 0.001953125
  %v1206 = vsub.f32 %v1192, %v1205
  %v1207 = vsub.f32 %v1193, %v1205
  %v1208 = vsub.f32 %v1194, %v1205
  %v1209 = vsub.f32 %v1195, %v1205
  %v1210 = vmul.f32 %v1206, %v116
  %v1211 = vmul.f32 %v1207, %v117
  %v1212 = vmul.f32 %v1208, %v118
  %v1213 = vmul.f32 %v1209, %v119
  %v1214 = vmul.f32 %v1210, %v1210
  %v1215 = vmul.f32 %v1211, %v1211
  %v1216 = vmul.f32 %v1212, %v1212
  %v1217 = vmul.f32 %v1213, %v1213
  %v1218 = vadd.f32 %v1214, %v1215
  %v1219 = vadd.f32 %v1218, %v1216
  %v1220 = vadd.f32 %v1219, %v1217
  %1221 = vadd.xlane.f32.xlu0 %v1220
  %v1222 = vpop.xlane.xlu0 %1221
  %v1223 = vmul.f32 %v1222, 0.001953125
  %v1224 = vadd.f32 %v1223, 1e-05
  %v1225 = vrsqrt.pop %v1224
  %v1226 = vmul.f32 %v1225, %v1224
  %v1227 = vmul.f32 %v1226, %v1225
  %v1228 = vmul.f32 0.5, %v1227
  %v1229 = vsub.f32 1.5, %v1228
  %v1230 = vmul.f32 %v1225, %v1229
  %v1231 = vmul.f32 %v1224, %v1230
  %vm1232 = vcmp.eq.f32.partialorder %v1224, inf
  %v1233 = vsel %vm1232, %v1224, %v1231
  %vm1234 = vcmp.eq.f32.partialorder %v1224, 0.0
  %v1235 = vand.u32 %v1224, 2147483648
  %v1236 = vsel %vm1234, %v1235, %v1233
  %v1237 = vadd.f32 %v1205, %v1236
  %vm1238 = vcmp.gt.f32.partialorder %v1192, %v1237
  %vm1239 = vcmp.gt.f32.partialorder %v1193, %v1237
  %vm1240 = vcmp.gt.f32.partialorder %v1194, %v1237
  %vm1241 = vcmp.gt.f32.partialorder %v1195, %v1237
  %v1242 = vsel %vm1238, 1, 0
  %v1243 = vsel %vm1239, 1, 0
  %v1244 = vsel %vm1240, 1, 0
  %v1245 = vsel %vm1241, 1, 0
  %v1246 = vcvt.s32.f32 %v1242
  %v1247 = vcvt.s32.f32 %v1243
  %v1248 = vcvt.s32.f32 %v1244
  %v1249 = vcvt.s32.f32 %v1245
  %v1250 = vld [vmem:[%s3] sm:$0xff]
  %v1251 = vld [vmem:[%s3 + $0x8] sm:$0xff]
  %v1253 = vsel %vm210, %v1250, 0
  %v1256 = vsel %vm210, %v1251, 0
  %1258 = vmatpush.msra.mxu0 0.0
  %1259 = vmatpush.msra.mxu0 0.0
  %1260 = vmatpush.msra.mxu0 0.0
  %1261 = vmatpush.msra.mxu0 0.0
  %1262 = vmatpush.msra.mxu0 0.0
  %1263 = vmatpush.msra.mxu0 0.0
  %1264 = vmatpush.msra.mxu0 0.0
  %1265 = vmatpush.msra.mxu0 0.0
  %1266 = vmatpush.msra.mxu0 0.0
  %1267 = vmatpush.msra.mxu0 0.0
  %1268 = vmatpush.msra.mxu0 0.0
  %1269 = vmatpush.msra.mxu0 0.0
  %1270 = vmatpush.msra.mxu0 0.0
  %1271 = vmatpush.msra.mxu0 0.0
  %1272 = vmatpush.msra.mxu0 0.0
  %1273 = vmatpush.msra.mxu0 %v1246
  %1274 = vmatmul.f32.gmra.mxu0 %v1253
  %v1275 = vpop.f32.mrf.mxu0
  %v1276 = vadd.f32 0.0, %v1275
  %1277 = vmatmul.f32.gmra.mxu0 %v1256
  %v1278 = vpop.f32.mrf.mxu0
  %v1279 = vadd.f32 0.0, %v1278
  %1280 = vdwg.mxu0
  %1281 = vmatpush.msra.mxu0 0.0
  %1282 = vmatpush.msra.mxu0 0.0
  %1283 = vmatpush.msra.mxu0 0.0
  %1284 = vmatpush.msra.mxu0 0.0
  %1285 = vmatpush.msra.mxu0 0.0
  %1286 = vmatpush.msra.mxu0 0.0
  %1287 = vmatpush.msra.mxu0 0.0
  %1288 = vmatpush.msra.mxu0 0.0
  %1289 = vmatpush.msra.mxu0 0.0
  %1290 = vmatpush.msra.mxu0 0.0
  %1291 = vmatpush.msra.mxu0 0.0
  %1292 = vmatpush.msra.mxu0 0.0
  %1293 = vmatpush.msra.mxu0 0.0
  %1294 = vmatpush.msra.mxu0 0.0
  %1295 = vmatpush.msra.mxu0 0.0
  %1296 = vmatpush.msra.mxu0 %v1247
  %1297 = vmatmul.f32.gmra.mxu0 %v1253
  %v1298 = vpop.f32.mrf.mxu0
  %v1299 = vadd.f32 0.0, %v1298
  %1300 = vmatmul.f32.gmra.mxu0 %v1256
  %v1301 = vpop.f32.mrf.mxu0
  %v1302 = vadd.f32 0.0, %v1301
  %1303 = vdwg.mxu0
  %1304 = vmatpush.msra.mxu0 0.0
  %1305 = vmatpush.msra.mxu0 0.0
  %1306 = vmatpush.msra.mxu0 0.0
  %1307 = vmatpush.msra.mxu0 0.0
  %1308 = vmatpush.msra.mxu0 0.0
  %1309 = vmatpush.msra.mxu0 0.0
  %1310 = vmatpush.msra.mxu0 0.0
  %1311 = vmatpush.msra.mxu0 0.0
  %1312 = vmatpush.msra.mxu0 0.0
  %1313 = vmatpush.msra.mxu0 0.0
  %1314 = vmatpush.msra.mxu0 0.0
  %1315 = vmatpush.msra.mxu0 0.0
  %1316 = vmatpush.msra.mxu0 0.0
  %1317 = vmatpush.msra.mxu0 0.0
  %1318 = vmatpush.msra.mxu0 0.0
  %1319 = vmatpush.msra.mxu0 %v1248
  %1320 = vmatmul.f32.gmra.mxu0 %v1253
  %v1321 = vpop.f32.mrf.mxu0
  %v1322 = vadd.f32 0.0, %v1321
  %1323 = vmatmul.f32.gmra.mxu0 %v1256
  %v1324 = vpop.f32.mrf.mxu0
  %v1325 = vadd.f32 0.0, %v1324
  %1326 = vdwg.mxu0
  %1327 = vmatpush.msra.mxu0 0.0
  %1328 = vmatpush.msra.mxu0 0.0
  %1329 = vmatpush.msra.mxu0 0.0
  %1330 = vmatpush.msra.mxu0 0.0
  %1331 = vmatpush.msra.mxu0 0.0
  %1332 = vmatpush.msra.mxu0 0.0
  %1333 = vmatpush.msra.mxu0 0.0
  %1334 = vmatpush.msra.mxu0 0.0
  %1335 = vmatpush.msra.mxu0 0.0
  %1336 = vmatpush.msra.mxu0 0.0
  %1337 = vmatpush.msra.mxu0 0.0
  %1338 = vmatpush.msra.mxu0 0.0
  %1339 = vmatpush.msra.mxu0 0.0
  %1340 = vmatpush.msra.mxu0 0.0
  %1341 = vmatpush.msra.mxu0 0.0
  %1342 = vmatpush.msra.mxu0 %v1249
  %1343 = vmatmul.f32.gmra.mxu0 %v1253
  %v1344 = vpop.f32.mrf.mxu0
  %v1345 = vadd.f32 0.0, %v1344
  %1346 = vmatmul.f32.gmra.mxu0 %v1256
  %v1347 = vpop.f32.mrf.mxu0
  %v1348 = vadd.f32 0.0, %v1347
  %1349 = vdwg.mxu0
  %v1350 = vmul.f32 %v1276, %v116
  %v1351 = vmul.f32 %v1299, %v117
  %v1352 = vmul.f32 %v1322, %v118
  %v1353 = vmul.f32 %v1345, %v119
  %v1354 = vmul.f32 %v1279, %v116
  %v1355 = vmul.f32 %v1302, %v117
  %v1356 = vmul.f32 %v1325, %v118
  %v1357 = vmul.f32 %v1348, %v119
  %v1358 = vadd.f32 %v1350, %v1351
  %v1359 = vadd.f32 %v1358, %v1352
  %v1360 = vadd.f32 %v1359, %v1353
  %1361 = vadd.xlane.f32.xlu0 %v1360
  %v1362 = vpop.xlane.xlu0 %1361
  %v1363 = vadd.f32 %v1354, %v1355
  %v1364 = vadd.f32 %v1363, %v1356
  %v1365 = vadd.f32 %v1364, %v1357
  %1366 = vadd.xlane.f32.xlu0 %v1365
  %v1367 = vpop.xlane.xlu0 %1366
  %v1368 = vmul.f32 %v1362, 0.001953125
  %v1369 = vmul.f32 %v1367, 0.001953125
  %v1370 = vsub.f32 %v1276, %v1368
  %v1371 = vsub.f32 %v1299, %v1368
  %v1372 = vsub.f32 %v1322, %v1368
  %v1373 = vsub.f32 %v1345, %v1368
  %v1374 = vsub.f32 %v1279, %v1369
  %v1375 = vsub.f32 %v1302, %v1369
  %v1376 = vsub.f32 %v1325, %v1369
  %v1377 = vsub.f32 %v1348, %v1369
  %v1378 = vmul.f32 %v1370, %v116
  %v1379 = vmul.f32 %v1371, %v117
  %v1380 = vmul.f32 %v1372, %v118
  %v1381 = vmul.f32 %v1373, %v119
  %v1382 = vmul.f32 %v1374, %v116
  %v1383 = vmul.f32 %v1375, %v117
  %v1384 = vmul.f32 %v1376, %v118
  %v1385 = vmul.f32 %v1377, %v119
  %v1386 = vmul.f32 %v1378, %v1378
  %v1387 = vmul.f32 %v1379, %v1379
  %v1388 = vmul.f32 %v1380, %v1380
  %v1389 = vmul.f32 %v1381, %v1381
  %v1390 = vmul.f32 %v1382, %v1382
  %v1391 = vmul.f32 %v1383, %v1383
  %v1392 = vmul.f32 %v1384, %v1384
  %v1393 = vmul.f32 %v1385, %v1385
  %v1394 = vadd.f32 %v1386, %v1387
  %v1395 = vadd.f32 %v1394, %v1388
  %v1396 = vadd.f32 %v1395, %v1389
  %1397 = vadd.xlane.f32.xlu0 %v1396
  %v1398 = vpop.xlane.xlu0 %1397
  %v1399 = vadd.f32 %v1390, %v1391
  %v1400 = vadd.f32 %v1399, %v1392
  %v1401 = vadd.f32 %v1400, %v1393
  %1402 = vadd.xlane.f32.xlu0 %v1401
  %v1403 = vpop.xlane.xlu0 %1402
  %v1404 = vmul.f32 %v1398, 0.001953125
  %v1405 = vmul.f32 %v1403, 0.001953125
  %v1406 = vadd.f32 %v1404, 1e-05
  %v1407 = vadd.f32 %v1405, 1e-05
  %v1408 = vrsqrt.pop %v1406
  %v1409 = vmul.f32 %v1408, %v1406
  %v1410 = vmul.f32 %v1409, %v1408
  %v1411 = vmul.f32 0.5, %v1410
  %v1412 = vsub.f32 1.5, %v1411
  %v1413 = vmul.f32 %v1408, %v1412
  %vm1414 = vweird.f32 %v1406
  %vm1415 = vweird.f32 %v1408
  %vm1416 = vmor %vm1414, %vm1415
  %v1417 = vsel %vm1416, %v1408, %v1413
  %v1418 = vrsqrt.pop %v1407
  %v1419 = vmul.f32 %v1418, %v1407
  %v1420 = vmul.f32 %v1419, %v1418
  %v1421 = vmul.f32 0.5, %v1420
  %v1422 = vsub.f32 1.5, %v1421
  %v1423 = vmul.f32 %v1418, %v1422
  %vm1424 = vweird.f32 %v1407
  %vm1425 = vweird.f32 %v1418
  %vm1426 = vmor %vm1424, %vm1425
  %v1427 = vsel %vm1426, %v1418, %v1423
  %v1428 = vmul.f32 %v22, %v116
  %v1429 = vmul.f32 %v23, %v117
  %v1430 = vmul.f32 %v24, %v118
  %v1431 = vmul.f32 %v25, %v119
  %v1432 = vmul.f32 %v26, %v116
  %v1433 = vmul.f32 %v27, %v117
  %v1434 = vmul.f32 %v28, %v118
  %v1435 = vmul.f32 %v29, %v119
  %v1436 = vadd.f32 %v1428, %v1429
  %v1437 = vadd.f32 %v1436, %v1430
  %v1438 = vadd.f32 %v1437, %v1431
  %1439 = vadd.xlane.f32.xlu0 %v1438
  %v1440 = vpop.xlane.xlu0 %1439
  %v1441 = vadd.f32 %v1432, %v1433
  %v1442 = vadd.f32 %v1441, %v1434
  %v1443 = vadd.f32 %v1442, %v1435
  %1444 = vadd.xlane.f32.xlu0 %v1443
  %v1445 = vpop.xlane.xlu0 %1444
  %v1446 = vmul.f32 %v1440, 0.001953125
  %v1447 = vmul.f32 %v1445, 0.001953125
  %v1448 = vsub.f32 %v22, %v1446
  %v1449 = vsub.f32 %v23, %v1446
  %v1450 = vsub.f32 %v24, %v1446
  %v1451 = vsub.f32 %v25, %v1446
  %v1452 = vsub.f32 %v26, %v1447
  %v1453 = vsub.f32 %v27, %v1447
  %v1454 = vsub.f32 %v28, %v1447
  %v1455 = vsub.f32 %v29, %v1447
  %v1456 = vmul.f32 %v1448, %v116
  %v1457 = vmul.f32 %v1449, %v117
  %v1458 = vmul.f32 %v1450, %v118
  %v1459 = vmul.f32 %v1451, %v119
  %v1460 = vmul.f32 %v1452, %v116
  %v1461 = vmul.f32 %v1453, %v117
  %v1462 = vmul.f32 %v1454, %v118
  %v1463 = vmul.f32 %v1455, %v119
  %v1464 = vmul.f32 %v1456, %v1456
  %v1465 = vmul.f32 %v1457, %v1457
  %v1466 = vmul.f32 %v1458, %v1458
  %v1467 = vmul.f32 %v1459, %v1459
  %v1468 = vmul.f32 %v1460, %v1460
  %v1469 = vmul.f32 %v1461, %v1461
  %v1470 = vmul.f32 %v1462, %v1462
  %v1471 = vmul.f32 %v1463, %v1463
  %v1472 = vadd.f32 %v1464, %v1465
  %v1473 = vadd.f32 %v1472, %v1466
  %v1474 = vadd.f32 %v1473, %v1467
  %1475 = vadd.xlane.f32.xlu0 %v1474
  %v1476 = vpop.xlane.xlu0 %1475
  %v1477 = vadd.f32 %v1468, %v1469
  %v1478 = vadd.f32 %v1477, %v1470
  %v1479 = vadd.f32 %v1478, %v1471
  %1480 = vadd.xlane.f32.xlu0 %v1479
  %v1481 = vpop.xlane.xlu0 %1480
  %v1482 = vmul.f32 %v1476, 0.001953125
  %v1483 = vmul.f32 %v1481, 0.001953125
  %v1484 = vadd.f32 %v1482, 1e-05
  %v1485 = vadd.f32 %v1483, 1e-05
  %v1486 = vrsqrt.pop %v1484
  %v1487 = vmul.f32 %v1486, %v1484
  %v1488 = vmul.f32 %v1487, %v1486
  %v1489 = vmul.f32 0.5, %v1488
  %v1490 = vsub.f32 1.5, %v1489
  %v1491 = vmul.f32 %v1486, %v1490
  %vm1492 = vweird.f32 %v1484
  %vm1493 = vweird.f32 %v1486
  %vm1494 = vmor %vm1492, %vm1493
  %v1495 = vsel %vm1494, %v1486, %v1491
  %v1496 = vrsqrt.pop %v1485
  %v1497 = vmul.f32 %v1496, %v1485
  %v1498 = vmul.f32 %v1497, %v1496
  %v1499 = vmul.f32 0.5, %v1498
  %v1500 = vsub.f32 1.5, %v1499
  %v1501 = vmul.f32 %v1496, %v1500
  %vm1502 = vweird.f32 %v1485
  %vm1503 = vweird.f32 %v1496
  %vm1504 = vmor %vm1502, %vm1503
  %v1505 = vsel %vm1504, %v1496, %v1501
  %v1506 = vmul.f32 %v1368, %v1417
  %v1507 = vmul.f32 %v1369, %v1427
  %v1508 = vadd.f32 %v1506, 1.4142135
  %v1509 = vadd.f32 %v1507, 1.4142135
  %v1510 = vmul.f32 %v1446, %v1495
  %v1511 = vmul.f32 %v1447, %v1505
  %v1512 = vadd.f32 %v1508, %v1510
  %v1513 = vadd.f32 %v1509, %v1511
  %v1514 = vmul.f32 %v1276, %v1417
  %v1515 = vmul.f32 %v1299, %v1417
  %v1516 = vmul.f32 %v1322, %v1417
  %v1517 = vmul.f32 %v1345, %v1417
  %v1518 = vmul.f32 %v1279, %v1427
  %v1519 = vmul.f32 %v1302, %v1427
  %v1520 = vmul.f32 %v1325, %v1427
  %v1521 = vmul.f32 %v1348, %v1427
  %v1522 = vmul.f32 %v22, %v1495
  %v1523 = vmul.f32 %v23, %v1495
  %v1524 = vmul.f32 %v24, %v1495
  %v1525 = vmul.f32 %v25, %v1495
  %v1526 = vmul.f32 %v26, %v1505
  %v1527 = vmul.f32 %v27, %v1505
  %v1528 = vmul.f32 %v28, %v1505
  %v1529 = vmul.f32 %v29, %v1505
  %v1530 = vadd.f32 %v1514, %v1522
  %v1531 = vadd.f32 %v1515, %v1523
  %v1532 = vadd.f32 %v1516, %v1524
  %v1533 = vadd.f32 %v1517, %v1525
  %v1534 = vadd.f32 %v1518, %v1526
  %v1535 = vadd.f32 %v1519, %v1527
  %v1536 = vadd.f32 %v1520, %v1528
  %v1537 = vadd.f32 %v1521, %v1529
  %vm1538 = vcmp.gt.f32.partialorder %v1530, %v1512
  %vm1539 = vcmp.gt.f32.partialorder %v1531, %v1512
  %vm1540 = vcmp.gt.f32.partialorder %v1532, %v1512
  %vm1541 = vcmp.gt.f32.partialorder %v1533, %v1512
  %vm1542 = vcmp.gt.f32.partialorder %v1534, %v1513
  %vm1543 = vcmp.gt.f32.partialorder %v1535, %v1513
  %vm1544 = vcmp.gt.f32.partialorder %v1536, %v1513
  %vm1545 = vcmp.gt.f32.partialorder %v1537, %v1513
  %v1546 = vsel %vm1538, 1, 0
  %v1547 = vsel %vm1539, 1, 0
  %v1548 = vsel %vm1540, 1, 0
  %v1549 = vsel %vm1541, 1, 0
  %v1550 = vsel %vm1542, 1, 0
  %v1551 = vsel %vm1543, 1, 0
  %v1552 = vsel %vm1544, 1, 0
  %v1553 = vsel %vm1545, 1, 0
  %v1554 = vcvt.s32.f32 %v1546
  %v1555 = vcvt.s32.f32 %v1547
  %v1556 = vcvt.s32.f32 %v1548
  %v1557 = vcvt.s32.f32 %v1549
  %v1558 = vcvt.s32.f32 %v1550
  %v1559 = vcvt.s32.f32 %v1551
  %v1560 = vcvt.s32.f32 %v1552
  %v1561 = vcvt.s32.f32 %v1553
  %1562 = vst [vmem:[%s5] sm:$0xff] %v1554
  %1563 = vst [vmem:[%s5 + $0x8] sm:$0xff] %v1555
  %1564 = vst [vmem:[%s5 + $0x10] sm:$0xff] %v1556
  %1565 = vst [vmem:[%s5 + $0x18] sm:$0xff] %v1557
  %1566 = vst [vmem:[%s5 + $0x20] sm:$0xff] %v1558
  %1567 = vst [vmem:[%s5 + $0x28] sm:$0xff] %v1559
  %1568 = vst [vmem:[%s5 + $0x30] sm:$0xff] %v1560
  %1569 = vst [vmem:[%s5 + $0x38] sm:$0xff] %v1561
  // Predicated region
  $region22: #{bottleneck_snn_forward.1} parent=0 // pred_check
    _
  $region23: #{bottleneck_snn_forward.1} parent=0 // pred_check_branch
    %1571 = sbr.rel (0) target = $region25
  $region24: #{bottleneck_snn_forward.1} parent=0 // pred_region
    _
  $region25: #{bottleneck_snn_forward.1} parent=0 // pred_fallthru
    _
  // Predicated region
  $region26: #{bottleneck_snn_forward.1} parent=0 // pred_check
    _
  $region27: #{bottleneck_snn_forward.1} parent=0 // pred_check_branch
    %1573 = sbr.rel (0) target = $region29
  $region28: #{bottleneck_snn_forward.1} parent=0 // pred_region
    _
  $region29: #{bottleneck_snn_forward.1} parent=0 // pred_fallthru
    _

</llo_original>
